<compile_context>
chip_gen: v7x
topology: tpu7x:2x2x1
jax: 0.10.0
libtpu: 0.0.40
codegen_flags: <defaults>
</compile_context>

<pallas_src>
import math
import functools

import numpy as np
import jax
import jax.numpy as jnp
from jax.experimental import pallas as pl
from jax.experimental.pallas import tpu as pltpu


# ----------------------------------------------------------------------------
# Fused multi-head-attention kernel: one grid step == one batch element.
# ----------------------------------------------------------------------------
def _fused_mha_kernel(q_ref, k_ref, wq_ref, bq_ref, wk_ref, bk_ref,
                      sel_ref, red_ref, wo3_ref, bo_ref, bias_ref, o_ref,
                      *, h, dk):
    s = q_ref.shape[1]          # seq length (== h, asserted on host)
    d = q_ref.shape[2]          # d_model

    xq = q_ref[0]               # (S, D)
    xk = k_ref[0]               # (S, D)

    # --- Q / K projections (1/sqrt(dk) pre-folded into wk/bk on the host) ---
    # TODO(synk): at realistic sizes cast MXU operands to bf16 (v6e/v7x),
    # keeping softmax and accumulators in f32.
    qp = jnp.dot(xq, wq_ref[...], preferred_element_type=jnp.float32) + bq_ref[...]
    kp = jnp.dot(xk, wk_ref[...], preferred_element_type=jnp.float32) + bk_ref[...]

    sel = sel_ref[...]          # (H, D) 0/1: sel[g, c] = 1 iff lane c belongs to head g

    # --- scores for ALL heads with one MXU matmul (OK while dk is tiny) -----
    # TODO(synk): for dk >= 128 use a per-head batched contraction
    # ('hsd,htd->hst') instead of this head expansion (it wastes (h-1)/h FLOPs).
    qexp = (qp[None, :, :] * sel[:, None, :]).reshape(h * s, d)       # (H*S, D)
    scores = jax.lax.dot_general(qexp, kp, (((1,), (1,)), ((), ())),
                                 preferred_element_type=jnp.float32)  # (H*S, S)

    # --- additive mask bias (0 / -1e9): broadcast over heads IN-KERNEL ------
    bias = jnp.broadcast_to(bias_ref[0][None], (h, s, s)).reshape(h * s, s)
    scores = scores + bias

    # --- numerically stable softmax (f32); exact divide on the normalize ----
    # (pl.reciprocal(approx=True) was flagged as too close to the tolerance.)
    m = jnp.max(scores, axis=-1, keepdims=True)
    e = jnp.exp(scores - m)
    denom = jnp.sum(e, axis=-1, keepdims=True)
    p = e / denom                                                     # (H*S, S)

    # --- attention * value (bug-faithful value-from-query) ------------------
    # v4[g, t, d_] = qp[g, t*dk + d_], so
    #   out4[g, s_, d_] = sum_t p[(g,s_), t] * qp[g, t*dk + d_]
    # computed with lane-level matmuls (no in-kernel lane reshapes):
    pexp = jnp.dot(p, sel, preferred_element_type=jnp.float32)        # (H*S, D): p[(g,s_), c//dk]
    qrep = jnp.broadcast_to(qp[:, None, :], (h, s, d)).reshape(h * s, d)  # qp[g, c]
    z = pexp * qrep                                                   # (H*S, D)
    out4 = jnp.dot(z, red_ref[...], preferred_element_type=jnp.float32)   # (H*S, dk)

    # --- output projection against the ORIGINAL W_o (reshaped, NOT tiled) ---
    # wo3[g, d_, o] = Wo[g*dk + d_, o]; standard s*d^2 FLOPs / d^2 weight bytes.
    outc = jnp.einsum('hsd,hdo->hso', out4.reshape(h, s, dk), wo3_ref[...],
                      preferred_element_type=jnp.float32)             # (H, S, D)
    o_ref[0] = jnp.sum(outc, axis=0) + bo_ref[...]                    # (S, D), lane-dense


# ----------------------------------------------------------------------------
# Host wrapper: parameter folding + one fused pallas_call over the batch.
# ----------------------------------------------------------------------------
def multi_head_attention_forward(params, q, k, v, mask, *, h):
    del v  # dead in the reference forward (value is rebuilt from the query)
    b, s, d_model = q.shape
    dk = d_model // h
    # The reference's `value = query.view(...)` only makes sense when seq == heads.
    assert s == h, "reference forward only executes when seq_len == num_heads"

    scale = jnp.float32(1.0 / math.sqrt(dk))
    # Fold 1/sqrt(dk) into the K projection (NOT Q: the value path reuses the
    # unscaled query projection, bug-faithfully).
    wk_scaled = params["wk_t"] * scale
    bk_scaled = (params["bk"] * scale).reshape(1, d_model)
    bq = params["bq"].reshape(1, d_model)
    bo = params["bo"].reshape(1, d_model)

    # Small constant helper matrices (hoisted out of the kernel body):
    lanes = jnp.arange(d_model, dtype=jnp.int32)
    sel = (lanes[None, :] // dk == jnp.arange(h, dtype=jnp.int32)[:, None]
           ).astype(jnp.float32)                                       # (H, D)
    red = (lanes[:, None] % dk == jnp.arange(dk, dtype=jnp.int32)[None, :]
           ).astype(jnp.float32)                                       # (D, dk)

    # Original W_o, merely reshaped per head (no replication): (H, dk, D)
    wo3 = params["wo_t"].reshape(h, dk, d_model)

    # Additive mask bias, NOT tiled over heads: (B, S, S)
    bias = jnp.where(mask.reshape(b, s, s) == 0,
                     jnp.float32(-1000000000.0), jnp.float32(0.0))

    kernel = functools.partial(_fused_mha_kernel, h=h, dk=dk)
    # Note: the grid-invariant weight/bias specs below could use
    # pipeline_mode=pl.Buffered(1) to single-buffer on v7x's 64 MiB VMEM.
    return pl.pallas_call(
        kernel,
        out_shape=jax.ShapeDtypeStruct((b, s, d_model), jnp.float32),
        grid=(b,),
        in_specs=[
            pl.BlockSpec((1, s, d_model), lambda i: (i, 0, 0)),        # q
            pl.BlockSpec((1, s, d_model), lambda i: (i, 0, 0)),        # k
            pl.BlockSpec((d_model, d_model), lambda i: (0, 0)),        # wq_t
            pl.BlockSpec((1, d_model), lambda i: (0, 0)),              # bq
            pl.BlockSpec((d_model, d_model), lambda i: (0, 0)),        # wk_t (scaled)
            pl.BlockSpec((1, d_model), lambda i: (0, 0)),              # bk (scaled)
            pl.BlockSpec((h, d_model), lambda i: (0, 0)),              # sel
            pl.BlockSpec((d_model, dk), lambda i: (0, 0)),             # red
            pl.BlockSpec((h, dk, d_model), lambda i: (0, 0, 0)),       # wo3 (= wo reshaped)
            pl.BlockSpec((1, d_model), lambda i: (0, 0)),              # bo
            pl.BlockSpec((1, s, s), lambda i: (i, 0, 0)),              # mask bias (B,S,S)
        ],
        out_specs=pl.BlockSpec((1, s, d_model), lambda i: (i, 0, 0)),
        compiler_params=pltpu.CompilerParams(
            dimension_semantics=("parallel",),
            vmem_limit_bytes=32 * 1024 * 1024),
    )(q, k, params["wq_t"], bq, wk_scaled, bk_scaled, sel, red, wo3, bo, bias)


# ----------------------------------------------------------------------------
# Pure-JAX reference (same bug-faithful semantics) for verification
# ----------------------------------------------------------------------------
def reference_forward(params, q, k, v, mask, *, h):
    b, s, d_model = q.shape
    dk = d_model // h
    Q = q @ params["wq_t"] + params["bq"]
    K = k @ params["wk_t"] + params["bk"]
    q4 = Q.reshape(b, s, h, dk).transpose(0, 2, 1, 3)
    k4 = K.reshape(b, s, h, dk).transpose(0, 2, 1, 3)
    v4 = jnp.transpose(q4, (0, 2, 1, 3))          # bug-faithful value-from-query
    scores = jnp.einsum("bhsd,bhtd->bhst", q4, k4) / math.sqrt(dk)
    scores = jnp.where(mask.reshape(b, 1, s, s) == 0, -1000000000.0, scores)
    attn = jax.nn.softmax(scores, axis=-1)
    out4 = jnp.einsum("bhst,bhtd->bhsd", attn, v4)
    x = out4.transpose(0, 2, 1, 3).reshape(b, s, d_model)
    return x @ params["wo_t"] + params["bo"]


if __name__ == "__main__":
    B, S, D_MODEL, H = 2, 8, 32, 8     # seq == heads (required by the reference code)
    DK = D_MODEL // H

    key = jax.random.PRNGKey(0)
    keys = jax.random.split(key, 12)

    def init_w(kk):
        return jax.random.normal(kk, (D_MODEL, D_MODEL), jnp.float32) * 0.05

    def init_b(kk):
        return jax.random.normal(kk, (D_MODEL,), jnp.float32) * 0.05

    params = {
        "wq_t": init_w(keys[0]), "bq": init_b(keys[1]),
        "wk_t": init_w(keys[2]), "bk": init_b(keys[3]),
        "wv_t": init_w(keys[4]), "bv": init_b(keys[5]),  # created but unused (dead in reference)
        "wo_t": init_w(keys[6]), "bo": init_b(keys[7]),
    }

    q_in = jax.random.normal(keys[8], (B, S, D_MODEL), jnp.float32)
    k_in = jax.random.normal(keys[9], (B, S, D_MODEL), jnp.float32)
    v_in = jax.random.normal(keys[10], (B, S, D_MODEL), jnp.float32)

    # causal mask, shape (B, 1, S, S): 1 = keep, 0 = mask out
    causal = jnp.tril(jnp.ones((S, S), jnp.float32))
    mask = jnp.broadcast_to(causal, (B, 1, S, S))

    out = multi_head_attention_forward(params, q_in, k_in, v_in, mask, h=H)
    out = jax.block_until_ready(out)

    ref = reference_forward(params, q_in, k_in, v_in, mask, h=H)
    np.testing.assert_allclose(np.asarray(out), np.asarray(ref), rtol=2e-3, atol=2e-3)

    print("KERNEL_OK")
</pallas_src>

<mosaic_0001>
module attributes {stable_mosaic.version = 11 : i64} {
  func.func @_fused_mha_kernel(%arg0: i32, %arg1: memref<1x8x32xf32, #tpu.memory_space<vmem>>, %arg2: memref<1x8x32xf32, #tpu.memory_space<vmem>>, %arg3: memref<32x32xf32, #tpu.memory_space<vmem>>, %arg4: memref<1x32xf32, #tpu.memory_space<vmem>>, %arg5: memref<32x32xf32, #tpu.memory_space<vmem>>, %arg6: memref<1x32xf32, #tpu.memory_space<vmem>>, %arg7: memref<8x32xf32, #tpu.memory_space<vmem>>, %arg8: memref<32x4xf32, #tpu.memory_space<vmem>>, %arg9: memref<8x4x32xf32, #tpu.memory_space<vmem>>, %arg10: memref<1x32xf32, #tpu.memory_space<vmem>>, %arg11: memref<1x8x8xf32, #tpu.memory_space<vmem>>, %arg12: memref<1x8x32xf32, #tpu.memory_space<vmem>>) attributes {dimension_semantics = [#tpu.dimension_semantics<parallel>], iteration_bounds = array<i64: 2>, scalar_prefetch = 0 : i64, scratch_operands = 0 : i64, tpu.core_type = #tpu.core_type<tc>, window_params = [{transform_indices = @transform_0, window_bounds = array<i64: 1, 8, 32>}, {transform_indices = @transform_1, window_bounds = array<i64: 1, 8, 32>}, {pipeline_mode = #tpu.pipeline_mode<synchronous>, transform_indices = @transform_2, window_bounds = array<i64: 32, 32>}, {pipeline_mode = #tpu.pipeline_mode<synchronous>, transform_indices = @transform_3, window_bounds = array<i64: 1, 32>}, {pipeline_mode = #tpu.pipeline_mode<synchronous>, transform_indices = @transform_4, window_bounds = array<i64: 32, 32>}, {pipeline_mode = #tpu.pipeline_mode<synchronous>, transform_indices = @transform_5, window_bounds = array<i64: 1, 32>}, {pipeline_mode = #tpu.pipeline_mode<synchronous>, transform_indices = @transform_6, window_bounds = array<i64: 8, 32>}, {pipeline_mode = #tpu.pipeline_mode<synchronous>, transform_indices = @transform_7, window_bounds = array<i64: 32, 4>}, {pipeline_mode = #tpu.pipeline_mode<synchronous>, transform_indices = @transform_8, window_bounds = array<i64: 8, 4, 32>}, {pipeline_mode = #tpu.pipeline_mode<synchronous>, transform_indices = @transform_9, window_bounds = array<i64: 1, 32>}, {transform_indices = @transform_10, window_bounds = array<i64: 1, 8, 8>}, {transform_indices = @transform_11, window_bounds = array<i64: 1, 8, 32>}]} {
    %c0 = arith.constant 0 : index
    %c0_0 = arith.constant 0 : index
    %c0_1 = arith.constant 0 : index
    %0 = vector.load %arg1[%c0, %c0_0, %c0_1] : memref<1x8x32xf32, #tpu.memory_space<vmem>>, vector<1x8x32xf32>
    %1 = vector.shape_cast %0 : vector<1x8x32xf32> to vector<8x32xf32>
    %c0_2 = arith.constant 0 : index
    %c0_3 = arith.constant 0 : index
    %c0_4 = arith.constant 0 : index
    %2 = vector.load %arg2[%c0_2, %c0_3, %c0_4] : memref<1x8x32xf32, #tpu.memory_space<vmem>>, vector<1x8x32xf32>
    %3 = vector.shape_cast %2 : vector<1x8x32xf32> to vector<8x32xf32>
    %c0_5 = arith.constant 0 : index
    %c0_6 = arith.constant 0 : index
    %4 = vector.load %arg3[%c0_5, %c0_6] : memref<32x32xf32, #tpu.memory_space<vmem>>, vector<32x32xf32>
    %cst = arith.constant dense<0.000000e+00> : vector<8x32xf32>
    %5 = tpu.matmul %1, %4, %cst {dimension_numbers = #tpu.dot_dimension_numbers<[1], [0], [0], [1], [0, 0, 1, 1], [], []>} : vector<8x32xf32>, vector<32x32xf32>, vector<8x32xf32> -> vector<8x32xf32>
    %c0_7 = arith.constant 0 : index
    %c0_8 = arith.constant 0 : index
    %6 = vector.load %arg4[%c0_7, %c0_8] : memref<1x32xf32, #tpu.memory_space<vmem>>, vector<1x32xf32>
    %7 = vector.broadcast %6 : vector<1x32xf32> to vector<8x32xf32>
    %8 = arith.addf %5, %7 : vector<8x32xf32>
    %c0_9 = arith.constant 0 : index
    %c0_10 = arith.constant 0 : index
    %9 = vector.load %arg5[%c0_9, %c0_10] : memref<32x32xf32, #tpu.memory_space<vmem>>, vector<32x32xf32>
    %cst_11 = arith.constant dense<0.000000e+00> : vector<8x32xf32>
    %10 = tpu.matmul %3, %9, %cst_11 {dimension_numbers = #tpu.dot_dimension_numbers<[1], [0], [0], [1], [0, 0, 1, 1], [], []>} : vector<8x32xf32>, vector<32x32xf32>, vector<8x32xf32> -> vector<8x32xf32>
    %c0_12 = arith.constant 0 : index
    %c0_13 = arith.constant 0 : index
    %11 = vector.load %arg6[%c0_12, %c0_13] : memref<1x32xf32, #tpu.memory_space<vmem>>, vector<1x32xf32>
    %12 = vector.broadcast %11 : vector<1x32xf32> to vector<8x32xf32>
    %13 = arith.addf %10, %12 : vector<8x32xf32>
    %c0_14 = arith.constant 0 : index
    %c0_15 = arith.constant 0 : index
    %14 = vector.load %arg7[%c0_14, %c0_15] : memref<8x32xf32, #tpu.memory_space<vmem>>, vector<8x32xf32>
    %15 = vector.shape_cast %8 : vector<8x32xf32> to vector<1x8x32xf32>
    %16 = vector.shape_cast %14 : vector<8x32xf32> to vector<8x1x32xf32>
    %17 = vector.broadcast %15 : vector<1x8x32xf32> to vector<8x8x32xf32>
    %18 = vector.broadcast %16 : vector<8x1x32xf32> to vector<8x8x32xf32>
    %19 = arith.mulf %17, %18 : vector<8x8x32xf32>
    %20 = vector.shape_cast %19 : vector<8x8x32xf32> to vector<64x32xf32>
    %cst_16 = arith.constant dense<0.000000e+00> : vector<64x8xf32>
    %21 = tpu.matmul %20, %13, %cst_16 {dimension_numbers = #tpu.dot_dimension_numbers<[1], [1], [0], [0], [0, 0, 1, 0], [], []>} : vector<64x32xf32>, vector<8x32xf32>, vector<64x8xf32> -> vector<64x8xf32>
    %c0_17 = arith.constant 0 : index
    %c0_18 = arith.constant 0 : index
    %c0_19 = arith.constant 0 : index
    %22 = vector.load %arg11[%c0_17, %c0_18, %c0_19] : memref<1x8x8xf32, #tpu.memory_space<vmem>>, vector<1x8x8xf32>
    %23 = vector.shape_cast %22 : vector<1x8x8xf32> to vector<8x8xf32>
    %24 = vector.shape_cast %23 : vector<8x8xf32> to vector<1x8x8xf32>
    %25 = vector.shape_cast %24 : vector<1x8x8xf32> to vector<1x8x8xf32>
    %26 = vector.broadcast %25 : vector<1x8x8xf32> to vector<8x8x8xf32>
    %27 = vector.shape_cast %26 : vector<8x8x8xf32> to vector<64x8xf32>
    %28 = arith.addf %21, %27 : vector<64x8xf32>
    %cst_20 = arith.constant dense<0xFF800000> : vector<64xf32>
    %29 = vector.multi_reduction <maximumf>, %28, %cst_20 [1] : vector<64x8xf32> to vector<64xf32>
    %30 = vector.shape_cast %29 : vector<64xf32> to vector<64x1xf32>
    %31 = vector.broadcast %30 : vector<64x1xf32> to vector<64x8xf32>
    %32 = arith.subf %28, %31 : vector<64x8xf32>
    %33 = math.exp %32 : vector<64x8xf32>
    %cst_21 = arith.constant dense<0.000000e+00> : vector<64xf32>
    %34 = vector.multi_reduction <add>, %33, %cst_21 [1] : vector<64x8xf32> to vector<64xf32>
    %35 = vector.shape_cast %34 : vector<64xf32> to vector<64x1xf32>
    %36 = vector.broadcast %35 : vector<64x1xf32> to vector<64x8xf32>
    %37 = arith.divf %33, %36 : vector<64x8xf32>
    %cst_22 = arith.constant dense<0.000000e+00> : vector<64x32xf32>
    %38 = tpu.matmul %37, %14, %cst_22 {dimension_numbers = #tpu.dot_dimension_numbers<[1], [0], [0], [1], [0, 0, 1, 1], [], []>} : vector<64x8xf32>, vector<8x32xf32>, vector<64x32xf32> -> vector<64x32xf32>
    %39 = vector.shape_cast %8 : vector<8x32xf32> to vector<8x1x32xf32>
    %40 = vector.shape_cast %39 : vector<8x1x32xf32> to vector<8x1x32xf32>
    %41 = vector.broadcast %40 : vector<8x1x32xf32> to vector<8x8x32xf32>
    %42 = vector.shape_cast %41 : vector<8x8x32xf32> to vector<64x32xf32>
    %43 = arith.mulf %38, %42 : vector<64x32xf32>
    %c0_23 = arith.constant 0 : index
    %c0_24 = arith.constant 0 : index
    %44 = vector.load %arg8[%c0_23, %c0_24] : memref<32x4xf32, #tpu.memory_space<vmem>>, vector<32x4xf32>
    %cst_25 = arith.constant dense<0.000000e+00> : vector<64x4xf32>
    %45 = tpu.matmul %43, %44, %cst_25 {dimension_numbers = #tpu.dot_dimension_numbers<[1], [0], [0], [1], [0, 0, 1, 1], [], []>} : vector<64x32xf32>, vector<32x4xf32>, vector<64x4xf32> -> vector<64x4xf32>
    %46 = vector.shape_cast %45 : vector<64x4xf32> to vector<8x8x4xf32>
    %c0_26 = arith.constant 0 : index
    %c0_27 = arith.constant 0 : index
    %c0_28 = arith.constant 0 : index
    %47 = vector.load %arg9[%c0_26, %c0_27, %c0_28] : memref<8x4x32xf32, #tpu.memory_space<vmem>>, vector<8x4x32xf32>
    "tpu.trace_start"() <{level = 10 : i32, message = "hsd,hdo->hso"}> : () -> ()
    %cst_29 = arith.constant dense<0.000000e+00> : vector<8x8x32xf32>
    %48 = tpu.matmul %46, %47, %cst_29 {dimension_numbers = #tpu.dot_dimension_numbers<[2], [1], [1], [2], [0, 0, 0, 1, 1, 2], [0], [0]>} : vector<8x8x4xf32>, vector<8x4x32xf32>, vector<8x8x32xf32> -> vector<8x8x32xf32>
    "tpu.trace_stop"() : () -> ()
    %cst_30 = arith.constant dense<0.000000e+00> : vector<8x32xf32>
    %49 = vector.multi_reduction <add>, %48, %cst_30 [0] : vector<8x8x32xf32> to vector<8x32xf32>
    %c0_31 = arith.constant 0 : index
    %c0_32 = arith.constant 0 : index
    %50 = vector.load %arg10[%c0_31, %c0_32] : memref<1x32xf32, #tpu.memory_space<vmem>>, vector<1x32xf32>
    %51 = vector.broadcast %50 : vector<1x32xf32> to vector<8x32xf32>
    %52 = arith.addf %49, %51 : vector<8x32xf32>
    %c0_33 = arith.constant 0 : index
    %c0_34 = arith.constant 0 : index
    %c0_35 = arith.constant 0 : index
    %53 = vector.load %arg12[%c0_33, %c0_34, %c0_35] : memref<1x8x32xf32, #tpu.memory_space<vmem>>, vector<1x8x32xf32>
    %54 = vector.shape_cast %53 : vector<1x8x32xf32> to vector<8x32xf32>
    %55 = vector.shape_cast %52 : vector<8x32xf32> to vector<1x8x32xf32>
    tpu.vector_store %arg12[%c0_33, %c0_34, %c0_35], %55 {strides = array<i32>} : memref<1x8x32xf32, #tpu.memory_space<vmem>>, vector<1x8x32xf32>,
    return
  }
  func.func @transform_0(%arg0: i32) -> (i32, i32, i32) {
    %c0_i32 = arith.constant 0 : i32
    %c0_i32_0 = arith.constant 0 : i32
    %c0_i32_1 = arith.constant 0 : i32
    return %arg0, %c0_i32, %c0_i32_0 : i32, i32, i32
  }
  func.func @transform_1(%arg0: i32) -> (i32, i32, i32) {
    %c0_i32 = arith.constant 0 : i32
    %c0_i32_0 = arith.constant 0 : i32
    %c0_i32_1 = arith.constant 0 : i32
    return %arg0, %c0_i32, %c0_i32_0 : i32, i32, i32
  }
  func.func @transform_2(%arg0: i32) -> (i32, i32) {
    %c0_i32 = arith.constant 0 : i32
    %c0_i32_0 = arith.constant 0 : i32
    %c0_i32_1 = arith.constant 0 : i32
    return %c0_i32, %c0_i32_0 : i32, i32
  }
  func.func @transform_3(%arg0: i32) -> (i32, i32) {
    %c0_i32 = arith.constant 0 : i32
    %c0_i32_0 = arith.constant 0 : i32
    %c0_i32_1 = arith.constant 0 : i32
    return %c0_i32, %c0_i32_0 : i32, i32
  }
  func.func @transform_4(%arg0: i32) -> (i32, i32) {
    %c0_i32 = arith.constant 0 : i32
    %c0_i32_0 = arith.constant 0 : i32
    %c0_i32_1 = arith.constant 0 : i32
    return %c0_i32, %c0_i32_0 : i32, i32
  }
  func.func @transform_5(%arg0: i32) -> (i32, i32) {
    %c0_i32 = arith.constant 0 : i32
    %c0_i32_0 = arith.constant 0 : i32
    %c0_i32_1 = arith.constant 0 : i32
    return %c0_i32, %c0_i32_0 : i32, i32
  }
  func.func @transform_6(%arg0: i32) -> (i32, i32) {
    %c0_i32 = arith.constant 0 : i32
    %c0_i32_0 = arith.constant 0 : i32
    %c0_i32_1 = arith.constant 0 : i32
    return %c0_i32, %c0_i32_0 : i32, i32
  }
  func.func @transform_7(%arg0: i32) -> (i32, i32) {
    %c0_i32 = arith.constant 0 : i32
    %c0_i32_0 = arith.constant 0 : i32
    %c0_i32_1 = arith.constant 0 : i32
    return %c0_i32, %c0_i32_0 : i32, i32
  }
  func.func @transform_8(%arg0: i32) -> (i32, i32, i32) {
    %c0_i32 = arith.constant 0 : i32
    %c0_i32_0 = arith.constant 0 : i32
    %c0_i32_1 = arith.constant 0 : i32
    %c0_i32_2 = arith.constant 0 : i32
    return %c0_i32, %c0_i32_0, %c0_i32_1 : i32, i32, i32
  }
  func.func @transform_9(%arg0: i32) -> (i32, i32) {
    %c0_i32 = arith.constant 0 : i32
    %c0_i32_0 = arith.constant 0 : i32
    %c0_i32_1 = arith.constant 0 : i32
    return %c0_i32, %c0_i32_0 : i32, i32
  }
  func.func @transform_10(%arg0: i32) -> (i32, i32, i32) {
    %c0_i32 = arith.constant 0 : i32
    %c0_i32_0 = arith.constant 0 : i32
    %c0_i32_1 = arith.constant 0 : i32
    return %arg0, %c0_i32, %c0_i32_0 : i32, i32, i32
  }
  func.func @transform_11(%arg0: i32) -> (i32, i32, i32) {
    %c0_i32 = arith.constant 0 : i32
    %c0_i32_0 = arith.constant 0 : i32
    %c0_i32_1 = arith.constant 0 : i32
    return %arg0, %c0_i32, %c0_i32_0 : i32, i32, i32
  }
}

</mosaic_0001>

<llo_original>
// kernel: tpu_custom_call.1
$region0: #{tpu_custom_call.1}
  #allocation0 [shape = 'u32[]', space=smem, size = 0x4, offset = 0x4, fixed_abs, tag = 'smem constant byte address 0x4 - core index']
  #allocation1 [shape = 'u32[144,128]{1,0:T(1,128)}', space=vmem, size = 0x12000, scoped, tag = 'internal scratch']
  %s0 = inlined_call_operand.hbm [shape: f32[2,8,32], index: 0, kind: input, shape index: {}]
  %s1 = inlined_call_operand.hbm [shape: f32[2,8,32], index: 1, kind: input, shape index: {}]
  %s2 = inlined_call_operand.vmem [shape: f32[32,32], index: 2, kind: input, shape index: {}]
  %s3 = inlined_call_operand.vmem [shape: f32[1,32], index: 3, kind: input, shape index: {}]
  %s4 = inlined_call_operand.hbm [shape: f32[32,32], index: 4, kind: input, shape index: {}]
  %s5 = inlined_call_operand.vmem [shape: f32[1,32], index: 5, kind: input, shape index: {}]
  %s6 = inlined_call_operand.hbm [shape: f32[8,32], index: 6, kind: input, shape index: {}]
  %s7 = inlined_call_operand.vmem [shape: f32[32,4], index: 7, kind: input, shape index: {}]
  %s8 = inlined_call_operand.vmem [shape: f32[8,4,32], index: 8, kind: input, shape index: {}]
  %s9 = inlined_call_operand.vmem [shape: f32[1,32], index: 9, kind: input, shape index: {}]
  %s10 = inlined_call_operand.hbm [shape: f32[2,8,8], index: 10, kind: input, shape index: {}]
  %s11 = inlined_call_operand.hbm [shape: f32[2,8,32], index: 11, kind: output, shape index: {}]
  %s12 = sld [smem:[#allocation0]]
  $region97: #{tpu_custom_call.1} parent=0
    _
  %s14 = ssub.s32 1, %s12
  %s15 = scalar_select 0, %s14, %s12
  $region1: #{tpu_custom_call.1} parent=0
    #allocation2 [shape = 'u8[8192]{0}', space=vmem, size = 0x2000, scoped, tag = 'input window, operand 0']
    #allocation3 [shape = 's32[2]{0}', space=sflag, size = 0x8, scoped, tag = 'scoped memory for tpu_custom_call.1']
    #allocation4 [shape = 's32[2]{0}', space=sflag, size = 0x8, scoped, tag = 'scoped memory for tpu_custom_call.1']
    #allocation5 [shape = 'u8[8192]{0}', space=vmem, size = 0x2000, scoped, tag = 'input window, operand 1']
    #allocation6 [shape = 's32[2]{0}', space=sflag, size = 0x8, scoped, tag = 'scoped memory for tpu_custom_call.1']
    #allocation7 [shape = 'u8[16384]{0}', space=vmem, size = 0x4000, scoped, tag = 'input window, operand 4, single buffered']
    #allocation8 [shape = 'u8[4096]{0}', space=vmem, size = 0x1000, scoped, tag = 'input window, operand 6, single buffered']
    #allocation9 [shape = 's32[1]{0}', space=sflag, size = 0x4, scoped, tag = 'scoped memory for tpu_custom_call.1']
    #allocation10 [shape = 'u8[8192]{0}', space=vmem, size = 0x2000, scoped, tag = 'input window, operand 10']
    #allocation11 [shape = 'u8[8192]{0}', space=vmem, size = 0x2000, scoped, tag = 'output window, operand 0']
    %16 = vsyncpa [#allocation3], 0
    %s17 = scalar_lea.sflag [#allocation3], 1
    %18 = vsyncpa %s17, 0
    %19 = vsyncpa [#allocation6], 0
    %s20 = scalar_lea.sflag [#allocation6], 1
    %21 = vsyncpa %s20, 0
    %22 = vsyncpa [#allocation9], 0
    %23 = vsyncpa [#allocation4], 0
    %s24 = scalar_lea.sflag [#allocation4], 1
    %25 = vsyncpa %s24, 0
    loop: start=0, step=1, limit=4
    $region2: #{tpu_custom_call.1} parent=1 // loop_pre_header
      _
    $region3: #{tpu_custom_call.1} parent=1 // loop_header
      %s27 = sphi 0, %s31
      %p28 = scmp.ge.s32.totalorder %s27, 4
      %s37 = sphi 0, %s39
      %s40 = sphi 0, %s37
      %s41 = sphi 0, %s40
      %s57 = sphi 0, %s41
      %s63 = sphi 0, %s65
      %s66 = sphi 0, %s63
      %s67 = sphi 0, %s66
      %s83 = sphi 0, %s67
      %s87 = sphi 0, %s87
      %s89 = sphi 0, %s87
      %s90 = sphi 0, %s89
      %s104 = sphi 0, %s90
      %s108 = sphi 0, %s108
      %s110 = sphi 0, %s108
      %s111 = sphi 0, %s110
      %s125 = sphi 0, %s111
      %s129 = sphi 0, %s129
      %s131 = sphi 0, %s129
      %s132 = sphi 0, %s131
      %s146 = sphi 0, %s132
      %s150 = sphi 0, %s150
      %s152 = sphi 0, %s150
      %s153 = sphi 0, %s152
      %s167 = sphi 0, %s153
      %s171 = sphi 0, %s171
      %s173 = sphi 0, %s171
      %s174 = sphi 0, %s173
      %s188 = sphi 0, %s174
      %s192 = sphi 0, %s192
      %s194 = sphi 0, %s192
      %s195 = sphi 0, %s194
      %s209 = sphi 0, %s195
      %s213 = sphi 0, %s213
      %s215 = sphi 0, %s213
      %s216 = sphi 0, %s215
      %s230 = sphi 0, %s216
      %s234 = sphi 0, %s234
      %s236 = sphi 0, %s234
      %s237 = sphi 0, %s236
      %s251 = sphi 0, %s237
      %s257 = sphi 0, %s259
      %s260 = sphi 0, %s257
      %s261 = sphi 0, %s260
      %s277 = sphi 0, %s261
      %s283 = sphi 0, %s285
      %s286 = sphi 0, %s283
      %s287 = sphi 0, %s286
      %s303 = sphi 0, %s287
    $region4: #{tpu_custom_call.1} parent=1 // loop_header_branch
      %30 = sbr.rel (%p28) target = $region8
    $region5: #{tpu_custom_call.1} parent=1 // loop_body
      %s32 = ssub.s32 %s27, 1
      %s33 = ssub.s32 %s27, 2
      %s34 = sadd.s32 %s27, 1
      %s35 = ssub.s32 %s27, %s34
      %p36 = scmp.eq.s32.totalorder %s35, 0
      %s38 = sadd.s32 %s37, 1
      %s39 = scalar_select %p36, %s37, %s38
      %p42 = pneg %p36
      %p43 = scmp.eq.s32.totalorder %s27, 1
      %p44 = por %p42, %p43
      %p45 = scmp.ne.s32.totalorder %s37, %s40
      %p46 = scmp.eq.s32.totalorder %s27, 0
      %p47 = por %p45, %p46
      %p48 = scmp.ne.s32.totalorder %s37, %s40
      %p49 = scmp.eq.s32.totalorder %s32, 1
      %p50 = por %p48, %p49
      %p51 = scmp.ne.s32.totalorder %s40, %s41
      %p52 = scmp.eq.s32.totalorder %s32, 0
      %p53 = por %p51, %p52
      %p54 = scmp.ne.s32.totalorder %s40, %s41
      %p55 = scmp.eq.s32.totalorder %s33, 1
      %p56 = por %p54, %p55
      %p58 = scmp.ne.s32.totalorder %s41, %s57
      %p59 = scmp.eq.s32.totalorder %s33, 0
      %p60 = por %p58, %p59
      %s61 = ssub.s32 %s27, %s34
      %p62 = scmp.eq.s32.totalorder %s61, 0
      %s64 = sadd.s32 %s63, 1
      %s65 = scalar_select %p62, %s63, %s64
      %p68 = pneg %p62
      %p69 = scmp.eq.s32.totalorder %s27, 1
      %p70 = por %p68, %p69
      %p71 = scmp.ne.s32.totalorder %s63, %s66
      %p72 = scmp.eq.s32.totalorder %s27, 0
      %p73 = por %p71, %p72
      %p74 = scmp.ne.s32.totalorder %s63, %s66
      %p75 = scmp.eq.s32.totalorder %s32, 1
      %p76 = por %p74, %p75
      %p77 = scmp.ne.s32.totalorder %s66, %s67
      %p78 = scmp.eq.s32.totalorder %s32, 0
      %p79 = por %p77, %p78
      %p80 = scmp.ne.s32.totalorder %s66, %s67
      %p81 = scmp.eq.s32.totalorder %s33, 1
      %p82 = por %p80, %p81
      %p84 = scmp.ne.s32.totalorder %s67, %s83
      %p85 = scmp.eq.s32.totalorder %s33, 0
      %p86 = por %p84, %p85
      %s88 = sadd.s32 %s87, 1
      %p91 = scmp.eq.s32.totalorder %s27, 1
      %p92 = scmp.ne.s32.totalorder %s87, %s89
      %p93 = scmp.eq.s32.totalorder %s27, 0
      %p94 = por %p92, %p93
      %p95 = scmp.ne.s32.totalorder %s87, %s89
      %p96 = scmp.eq.s32.totalorder %s32, 1
      %p97 = por %p95, %p96
      %p98 = scmp.ne.s32.totalorder %s89, %s90
      %p99 = scmp.eq.s32.totalorder %s32, 0
      %p100 = por %p98, %p99
      %p101 = scmp.ne.s32.totalorder %s89, %s90
      %p102 = scmp.eq.s32.totalorder %s33, 1
      %p103 = por %p101, %p102
      %p105 = scmp.ne.s32.totalorder %s90, %s104
      %p106 = scmp.eq.s32.totalorder %s33, 0
      %p107 = por %p105, %p106
      %s109 = sadd.s32 %s108, 1
      %p112 = scmp.eq.s32.totalorder %s27, 1
      %p113 = scmp.ne.s32.totalorder %s108, %s110
      %p114 = scmp.eq.s32.totalorder %s27, 0
      %p115 = por %p113, %p114
      %p116 = scmp.ne.s32.totalorder %s108, %s110
      %p117 = scmp.eq.s32.totalorder %s32, 1
      %p118 = por %p116, %p117
      %p119 = scmp.ne.s32.totalorder %s110, %s111
      %p120 = scmp.eq.s32.totalorder %s32, 0
      %p121 = por %p119, %p120
      %p122 = scmp.ne.s32.totalorder %s110, %s111
      %p123 = scmp.eq.s32.totalorder %s33, 1
      %p124 = por %p122, %p123
      %p126 = scmp.ne.s32.totalorder %s111, %s125
      %p127 = scmp.eq.s32.totalorder %s33, 0
      %p128 = por %p126, %p127
      %s130 = sadd.s32 %s129, 1
      %p133 = scmp.eq.s32.totalorder %s27, 1
      %p134 = scmp.ne.s32.totalorder %s129, %s131
      %p135 = scmp.eq.s32.totalorder %s27, 0
      %p136 = por %p134, %p135
      %p137 = scmp.ne.s32.totalorder %s129, %s131
      %p138 = scmp.eq.s32.totalorder %s32, 1
      %p139 = por %p137, %p138
      %p140 = scmp.ne.s32.totalorder %s131, %s132
      %p141 = scmp.eq.s32.totalorder %s32, 0
      %p142 = por %p140, %p141
      %p143 = scmp.ne.s32.totalorder %s131, %s132
      %p144 = scmp.eq.s32.totalorder %s33, 1
      %p145 = por %p143, %p144
      %p147 = scmp.ne.s32.totalorder %s132, %s146
      %p148 = scmp.eq.s32.totalorder %s33, 0
      %p149 = por %p147, %p148
      %s151 = sadd.s32 %s150, 1
      %p154 = scmp.eq.s32.totalorder %s27, 1
      %p155 = scmp.ne.s32.totalorder %s150, %s152
      %p156 = scmp.eq.s32.totalorder %s27, 0
      %p157 = por %p155, %p156
      %p158 = scmp.ne.s32.totalorder %s150, %s152
      %p159 = scmp.eq.s32.totalorder %s32, 1
      %p160 = por %p158, %p159
      %p161 = scmp.ne.s32.totalorder %s152, %s153
      %p162 = scmp.eq.s32.totalorder %s32, 0
      %p163 = por %p161, %p162
      %p164 = scmp.ne.s32.totalorder %s152, %s153
      %p165 = scmp.eq.s32.totalorder %s33, 1
      %p166 = por %p164, %p165
      %p168 = scmp.ne.s32.totalorder %s153, %s167
      %p169 = scmp.eq.s32.totalorder %s33, 0
      %p170 = por %p168, %p169
      %s172 = sadd.s32 %s171, 1
      %p175 = scmp.eq.s32.totalorder %s27, 1
      %p176 = scmp.ne.s32.totalorder %s171, %s173
      %p177 = scmp.eq.s32.totalorder %s27, 0
      %p178 = por %p176, %p177
      %p179 = scmp.ne.s32.totalorder %s171, %s173
      %p180 = scmp.eq.s32.totalorder %s32, 1
      %p181 = por %p179, %p180
      %p182 = scmp.ne.s32.totalorder %s173, %s174
      %p183 = scmp.eq.s32.totalorder %s32, 0
      %p184 = por %p182, %p183
      %p185 = scmp.ne.s32.totalorder %s173, %s174
      %p186 = scmp.eq.s32.totalorder %s33, 1
      %p187 = por %p185, %p186
      %p189 = scmp.ne.s32.totalorder %s174, %s188
      %p190 = scmp.eq.s32.totalorder %s33, 0
      %p191 = por %p189, %p190
      %s193 = sadd.s32 %s192, 1
      %p196 = scmp.eq.s32.totalorder %s27, 1
      %p197 = scmp.ne.s32.totalorder %s192, %s194
      %p198 = scmp.eq.s32.totalorder %s27, 0
      %p199 = por %p197, %p198
      %p200 = scmp.ne.s32.totalorder %s192, %s194
      %p201 = scmp.eq.s32.totalorder %s32, 1
      %p202 = por %p200, %p201
      %p203 = scmp.ne.s32.totalorder %s194, %s195
      %p204 = scmp.eq.s32.totalorder %s32, 0
      %p205 = por %p203, %p204
      %p206 = scmp.ne.s32.totalorder %s194, %s195
      %p207 = scmp.eq.s32.totalorder %s33, 1
      %p208 = por %p206, %p207
      %p210 = scmp.ne.s32.totalorder %s195, %s209
      %p211 = scmp.eq.s32.totalorder %s33, 0
      %p212 = por %p210, %p211
      %s214 = sadd.s32 %s213, 1
      %p217 = scmp.eq.s32.totalorder %s27, 1
      %p218 = scmp.ne.s32.totalorder %s213, %s215
      %p219 = scmp.eq.s32.totalorder %s27, 0
      %p220 = por %p218, %p219
      %p221 = scmp.ne.s32.totalorder %s213, %s215
      %p222 = scmp.eq.s32.totalorder %s32, 1
      %p223 = por %p221, %p222
      %p224 = scmp.ne.s32.totalorder %s215, %s216
      %p225 = scmp.eq.s32.totalorder %s32, 0
      %p226 = por %p224, %p225
      %p227 = scmp.ne.s32.totalorder %s215, %s216
      %p228 = scmp.eq.s32.totalorder %s33, 1
      %p229 = por %p227, %p228
      %p231 = scmp.ne.s32.totalorder %s216, %s230
      %p232 = scmp.eq.s32.totalorder %s33, 0
      %p233 = por %p231, %p232
      %s235 = sadd.s32 %s234, 1
      %p238 = scmp.eq.s32.totalorder %s27, 1
      %p239 = scmp.ne.s32.totalorder %s234, %s236
      %p240 = scmp.eq.s32.totalorder %s27, 0
      %p241 = por %p239, %p240
      %p242 = scmp.ne.s32.totalorder %s234, %s236
      %p243 = scmp.eq.s32.totalorder %s32, 1
      %p244 = por %p242, %p243
      %p245 = scmp.ne.s32.totalorder %s236, %s237
      %p246 = scmp.eq.s32.totalorder %s32, 0
      %p247 = por %p245, %p246
      %p248 = scmp.ne.s32.totalorder %s236, %s237
      %p249 = scmp.eq.s32.totalorder %s33, 1
      %p250 = por %p248, %p249
      %p252 = scmp.ne.s32.totalorder %s237, %s251
      %p253 = scmp.eq.s32.totalorder %s33, 0
      %p254 = por %p252, %p253
      %s255 = ssub.s32 %s27, %s34
      %p256 = scmp.eq.s32.totalorder %s255, 0
      %s258 = sadd.s32 %s257, 1
      %s259 = scalar_select %p256, %s257, %s258
      %p262 = pneg %p256
      %p263 = scmp.eq.s32.totalorder %s27, 1
      %p264 = por %p262, %p263
      %p265 = scmp.ne.s32.totalorder %s257, %s260
      %p266 = scmp.eq.s32.totalorder %s27, 0
      %p267 = por %p265, %p266
      %p268 = scmp.ne.s32.totalorder %s257, %s260
      %p269 = scmp.eq.s32.totalorder %s32, 1
      %p270 = por %p268, %p269
      %p271 = scmp.ne.s32.totalorder %s260, %s261
      %p272 = scmp.eq.s32.totalorder %s32, 0
      %p273 = por %p271, %p272
      %p274 = scmp.ne.s32.totalorder %s260, %s261
      %p275 = scmp.eq.s32.totalorder %s33, 1
      %p276 = por %p274, %p275
      %p278 = scmp.ne.s32.totalorder %s261, %s277
      %p279 = scmp.eq.s32.totalorder %s33, 0
      %p280 = por %p278, %p279
      %s281 = ssub.s32 %s27, %s34
      %p282 = scmp.eq.s32.totalorder %s281, 0
      %s284 = sadd.s32 %s283, 1
      %s285 = scalar_select %p282, %s283, %s284
      %p288 = pneg %p282
      %p289 = scmp.eq.s32.totalorder %s27, 1
      %p290 = por %p288, %p289
      %p291 = scmp.ne.s32.totalorder %s283, %s286
      %p292 = scmp.eq.s32.totalorder %s27, 0
      %p293 = por %p291, %p292
      %p294 = scmp.ne.s32.totalorder %s283, %s286
      %p295 = scmp.eq.s32.totalorder %s32, 1
      %p296 = por %p294, %p295
      %p297 = scmp.ne.s32.totalorder %s286, %s287
      %p298 = scmp.eq.s32.totalorder %s32, 0
      %p299 = por %p297, %p298
      %p300 = scmp.ne.s32.totalorder %s286, %s287
      %p301 = scmp.eq.s32.totalorder %s33, 1
      %p302 = por %p300, %p301
      %p304 = scmp.ne.s32.totalorder %s287, %s303
      %p305 = scmp.eq.s32.totalorder %s33, 0
      %p306 = por %p304, %p305
      %p307 = scmp.le.s32.totalorder 1, %s27
      %p308 = scmp.lt.s32.totalorder %s27, 3
      %p309 = pnand %p307, %p308
      %p310 = pneg %p309
      // Predicated region
      $region9: #{tpu_custom_call.1} parent=5 // pred_check
        _
      $region10: #{tpu_custom_call.1} parent=5 // pred_check_branch
        %312 = sbr.rel (%p309) target = $region12
      $region11: #{tpu_custom_call.1} parent=5 // pred_region
        %s313 = ssub.s32 %s27, 1
        // Predicated region
        $region13: #{tpu_custom_call.1} parent=11 // pred_check
          %p314 = pneg %p100
        $region14: #{tpu_custom_call.1} parent=11 // pred_check_branch
          %316 = sbr.rel (%p314) target = $region16
        $region15: #{tpu_custom_call.1} parent=11 // pred_region
          _
        $region16: #{tpu_custom_call.1} parent=11 // pred_fallthru
          _
        // Predicated region
        $region17: #{tpu_custom_call.1} parent=11 // pred_check
          %p317 = pneg %p121
        $region18: #{tpu_custom_call.1} parent=11 // pred_check_branch
          %319 = sbr.rel (%p317) target = $region20
        $region19: #{tpu_custom_call.1} parent=11 // pred_region
          _
        $region20: #{tpu_custom_call.1} parent=11 // pred_fallthru
          _
        // Predicated region
        $region21: #{tpu_custom_call.1} parent=11 // pred_check
          %p320 = pneg %p142
        $region22: #{tpu_custom_call.1} parent=11 // pred_check_branch
          %322 = sbr.rel (%p320) target = $region24
        $region23: #{tpu_custom_call.1} parent=11 // pred_region
          %s324 = ssub.s32 512, 512
          %325 = vsyncadd [#allocation6], %s324
          %s326 = sshll.u32 [#allocation7], 4
          %s327 = int_to_ptr.vmem [resolvable:$true] %s326
          %332 = dma.hbm_to_vmem [thread:$0]  %s4, 512, %s327, [#allocation6], 128, 128, 8
        $region24: #{tpu_custom_call.1} parent=11 // pred_fallthru
          _
        // Predicated region
        $region25: #{tpu_custom_call.1} parent=11 // pred_check
          %p333 = pneg %p163
        $region26: #{tpu_custom_call.1} parent=11 // pred_check_branch
          %335 = sbr.rel (%p333) target = $region28
        $region27: #{tpu_custom_call.1} parent=11 // pred_region
          _
        $region28: #{tpu_custom_call.1} parent=11 // pred_fallthru
          _
        // Predicated region
        $region29: #{tpu_custom_call.1} parent=11 // pred_check
          %p336 = pneg %p184
        $region30: #{tpu_custom_call.1} parent=11 // pred_check_branch
          %338 = sbr.rel (%p336) target = $region32
        $region31: #{tpu_custom_call.1} parent=11 // pred_region
          %s340 = ssub.s32 128, 128
          %341 = vsyncadd [#allocation9], %s340
          %s343 = sshll.u32 [#allocation8], 4
          %s344 = int_to_ptr.vmem [resolvable:$true] %s343
          %346 = dma.hbm_to_vmem [thread:$0]  %s6, 128, %s344, [#allocation9]
        $region32: #{tpu_custom_call.1} parent=11 // pred_fallthru
          _
        // Predicated region
        $region33: #{tpu_custom_call.1} parent=11 // pred_check
          %p347 = pneg %p205
        $region34: #{tpu_custom_call.1} parent=11 // pred_check_branch
          %349 = sbr.rel (%p347) target = $region36
        $region35: #{tpu_custom_call.1} parent=11 // pred_region
          _
        $region36: #{tpu_custom_call.1} parent=11 // pred_fallthru
          _
        // Predicated region
        $region37: #{tpu_custom_call.1} parent=11 // pred_check
          %p350 = pneg %p226
        $region38: #{tpu_custom_call.1} parent=11 // pred_check_branch
          %352 = sbr.rel (%p350) target = $region40
        $region39: #{tpu_custom_call.1} parent=11 // pred_region
          _
        $region40: #{tpu_custom_call.1} parent=11 // pred_fallthru
          _
        // Predicated region
        $region41: #{tpu_custom_call.1} parent=11 // pred_check
          %p353 = pneg %p247
        $region42: #{tpu_custom_call.1} parent=11 // pred_check_branch
          %355 = sbr.rel (%p353) target = $region44
        $region43: #{tpu_custom_call.1} parent=11 // pred_region
          _
        $region44: #{tpu_custom_call.1} parent=11 // pred_fallthru
          _
      $region12: #{tpu_custom_call.1} parent=5 // pred_fallthru
        _
      %p356 = scmp.lt.s32.totalorder %s27, 2
      // Predicated region
      $region45: #{tpu_custom_call.1} parent=5 // pred_check
        %p357 = pneg %p356
      $region46: #{tpu_custom_call.1} parent=5 // pred_check_branch
        %359 = sbr.rel (%p357) target = $region48
      $region47: #{tpu_custom_call.1} parent=5 // pred_region
        // Predicated region
        $region49: #{tpu_custom_call.1} parent=47 // pred_check
          %p360 = pneg %p47
        $region50: #{tpu_custom_call.1} parent=47 // pred_check_branch
          %362 = sbr.rel (%p360) target = $region52
        $region51: #{tpu_custom_call.1} parent=47 // pred_region
          %s363 = sand.u32 %s27, 1
          %s364 = scalar_lea.sflag [#allocation3], %s363
          %s365 = sand.u32 %s37, 1
          %s366 = smul.addr %s365, 8
          %s367 = scalar_lea.vmem [#allocation2], %s366
          %s369 = ssub.s32 128, 128
          %370 = vsyncadd %s364, %s369
          %s371 = smul.addr %s27, 128
          %s372 = scalar_lea.hbm %s0, %s371
          %s374 = sshll.u32 %s367, 4
          %s375 = int_to_ptr.vmem [resolvable:$true] %s374
          %377 = dma.hbm_to_vmem [thread:$0]  %s372, 128, %s375, %s364
        $region52: #{tpu_custom_call.1} parent=47 // pred_fallthru
          _
        // Predicated region
        $region53: #{tpu_custom_call.1} parent=47 // pred_check
          %p378 = pneg %p73
        $region54: #{tpu_custom_call.1} parent=47 // pred_check_branch
          %380 = sbr.rel (%p378) target = $region56
        $region55: #{tpu_custom_call.1} parent=47 // pred_region
          %s381 = sand.u32 %s27, 1
          %s382 = scalar_lea.sflag [#allocation6], %s381
          %s383 = sand.u32 %s63, 1
          %s384 = smul.addr %s383, 8
          %s385 = scalar_lea.vmem [#allocation5], %s384
          %s387 = ssub.s32 128, 128
          %388 = vsyncadd %s382, %s387
          %s389 = smul.addr %s27, 128
          %s390 = scalar_lea.hbm %s1, %s389
          %s392 = sshll.u32 %s385, 4
          %s393 = int_to_ptr.vmem [resolvable:$true] %s392
          %395 = dma.hbm_to_vmem [thread:$0]  %s390, 128, %s393, %s382
        $region56: #{tpu_custom_call.1} parent=47 // pred_fallthru
          _
        // Predicated region
        $region57: #{tpu_custom_call.1} parent=47 // pred_check
          %p396 = pneg %p267
        $region58: #{tpu_custom_call.1} parent=47 // pred_check_branch
          %398 = sbr.rel (%p396) target = $region60
        $region59: #{tpu_custom_call.1} parent=47 // pred_region
          %s399 = sand.u32 %s27, 1
          %s400 = scalar_lea.sflag [#allocation3], %s399
          %s401 = sand.u32 %s257, 1
          %s402 = smul.addr %s401, 8
          %s403 = scalar_lea.vmem [#allocation10], %s402
          %s405 = ssub.s32 128, 128
          %406 = vsyncadd %s400, %s405
          %s407 = smul.addr %s27, 128
          %s408 = scalar_lea.hbm %s10, %s407
          %s410 = sshll.u32 %s403, 4
          %s411 = int_to_ptr.vmem [resolvable:$true] %s410
          %413 = dma.hbm_to_vmem [thread:$0]  %s408, 128, %s411, %s400
        $region60: #{tpu_custom_call.1} parent=47 // pred_fallthru
          _
      $region48: #{tpu_custom_call.1} parent=5 // pred_fallthru
        _
      %p414 = scmp.le.s32.totalorder 1, %s27
      %p415 = scmp.lt.s32.totalorder %s27, 3
      %p416 = pnand %p414, %p415
      %p417 = pneg %p416
      // Predicated region
      $region61: #{tpu_custom_call.1} parent=5 // pred_check
        _
      $region62: #{tpu_custom_call.1} parent=5 // pred_check_branch
        %419 = sbr.rel (%p416) target = $region64
      $region63: #{tpu_custom_call.1} parent=5 // pred_region
        %s420 = ssub.s32 %s27, 1
        %s421 = sand.u32 %s32, 1
        %s422 = scalar_lea.sflag [#allocation3], %s421
        %s423 = sand.u32 %s40, 1
        %s424 = smul.addr %s423, 8
        %s425 = scalar_lea.vmem [#allocation2], %s424
        // Predicated region
        $region65: #{tpu_custom_call.1} parent=63 // pred_check
          %p426 = pneg %p53
        $region66: #{tpu_custom_call.1} parent=63 // pred_check_branch
          %428 = sbr.rel (%p426) target = $region68
        $region67: #{tpu_custom_call.1} parent=63 // pred_region
          %429 = dma.done %s422, 128
        $region68: #{tpu_custom_call.1} parent=63 // pred_fallthru
          _
        %s430 = sand.u32 %s32, 1
        %s431 = scalar_lea.sflag [#allocation6], %s430
        %s432 = sand.u32 %s66, 1
        %s433 = smul.addr %s432, 8
        %s434 = scalar_lea.vmem [#allocation5], %s433
        // Predicated region
        $region69: #{tpu_custom_call.1} parent=63 // pred_check
          %p435 = pneg %p79
        $region70: #{tpu_custom_call.1} parent=63 // pred_check_branch
          %437 = sbr.rel (%p435) target = $region72
        $region71: #{tpu_custom_call.1} parent=63 // pred_region
          %438 = dma.done %s431, 128
        $region72: #{tpu_custom_call.1} parent=63 // pred_fallthru
          _
        // Predicated region
        $region73: #{tpu_custom_call.1} parent=63 // pred_check
          %p439 = pneg %p142
        $region74: #{tpu_custom_call.1} parent=63 // pred_check_branch
          %441 = sbr.rel (%p439) target = $region76
        $region75: #{tpu_custom_call.1} parent=63 // pred_region
          %442 = dma.done [#allocation6], 512
        $region76: #{tpu_custom_call.1} parent=63 // pred_fallthru
          _
        // Predicated region
        $region77: #{tpu_custom_call.1} parent=63 // pred_check
          %p443 = pneg %p184
        $region78: #{tpu_custom_call.1} parent=63 // pred_check_branch
          %445 = sbr.rel (%p443) target = $region80
        $region79: #{tpu_custom_call.1} parent=63 // pred_region
          %446 = dma.done [#allocation9], 128
        $region80: #{tpu_custom_call.1} parent=63 // pred_fallthru
          _
        %s447 = sand.u32 %s32, 1
        %s448 = scalar_lea.sflag [#allocation3], %s447
        %s449 = sand.u32 %s260, 1
        %s450 = smul.addr %s449, 8
        %s451 = scalar_lea.vmem [#allocation10], %s450
        // Predicated region
        $region81: #{tpu_custom_call.1} parent=63 // pred_check
          %p452 = pneg %p273
        $region82: #{tpu_custom_call.1} parent=63 // pred_check_branch
          %454 = sbr.rel (%p452) target = $region84
        $region83: #{tpu_custom_call.1} parent=63 // pred_region
          %455 = dma.done %s448, 128
        $region84: #{tpu_custom_call.1} parent=63 // pred_fallthru
          _
        %s456 = sand.u32 %s32, 1
        %s457 = scalar_lea.sflag [#allocation3], %s456
        %s458 = sand.u32 %s40, 1
        %s459 = smul.addr %s458, 8
        %s460 = scalar_lea.vmem [#allocation2], %s459
        %p461 = pneg %p53
        %p462 = pneg %p50
        %s463 = sand.u32 %s32, 1
        %s464 = scalar_lea.sflag [#allocation6], %s463
        %s465 = sand.u32 %s66, 1
        %s466 = smul.addr %s465, 8
        %s467 = scalar_lea.vmem [#allocation5], %s466
        %p468 = pneg %p79
        %p469 = pneg %p76
        %p470 = pneg %p100
        %p471 = pneg %p97
        %p472 = pneg %p121
        %p473 = pneg %p118
        %p474 = pneg %p142
        %p475 = pneg %p139
        %p476 = pneg %p163
        %p477 = pneg %p160
        %p478 = pneg %p184
        %p479 = pneg %p181
        %p480 = pneg %p205
        %p481 = pneg %p202
        %p482 = pneg %p226
        %p483 = pneg %p223
        %p484 = pneg %p247
        %p485 = pneg %p244
        %s486 = sand.u32 %s32, 1
        %s487 = scalar_lea.sflag [#allocation3], %s486
        %s488 = sand.u32 %s260, 1
        %s489 = smul.addr %s488, 8
        %s490 = scalar_lea.vmem [#allocation10], %s489
        %p491 = pneg %p273
        %p492 = pneg %p270
        %p493 = pneg %p299
        %p494 = pneg %p296
        %s495 = sand.u32 %s286, 1
        %s496 = scalar_lea.sflag [#allocation4], %s495
        %s497 = sand.u32 %s286, 1
        %s498 = smul.addr %s497, 8
        %s499 = scalar_lea.vmem [#allocation11], %s498
        %v500 = vld [vmem:[%s425] sm:$0xff]
        %v501 = vld [vmem:[%s434] sm:$0xff]
        %v502 = vld [vmem:[%s2] sm:$0xff]
        %v503 = vld [vmem:[%s2 + $0x8] sm:$0xff]
        %v504 = vld [vmem:[%s2 + $0x10] sm:$0xff]
        %v505 = vld [vmem:[%s2 + $0x18] sm:$0xff]
        %v506 = vld [vmem:[%s3] sm:$0x1]
        %v508 = vlaneseq
        %v509 = vshrl.u32 %v508, 7
        %v510 = vsub.s32 0, %v509
        %v511 = vrot.slane %v506, %v510
        %vm513 = vcmask 261120
        %v515 = vsel %vm513, %v500, 0
        %517 = vmatprep.subr.mxu0 0.0
        %518 = vmatpush1.msra.mxu0 %v502
        %519 = vmatprep.subr.mxu0 0.0
        %520 = vmatpush1.msra.mxu0 %v503
        %521 = vmatprep.subr.mxu0 0.0
        %522 = vmatpush1.msra.mxu0 %v504
        %523 = vmatprep.subr.mxu0 0.0
        %524 = vmatpush1.msra.mxu0 %v505
        %525 = vmatprep.subr.mxu0 0.0
        %526 = vmatpush1.msra.mxu0 0.0
        %527 = vmatprep.subr.mxu0 0.0
        %528 = vmatpush1.msra.mxu0 0.0
        %529 = vmatprep.subr.mxu0 0.0
        %530 = vmatpush1.msra.mxu0 0.0
        %531 = vmatprep.subr.mxu0 0.0
        %532 = vmatpush1.msra.mxu0 0.0
        %533 = vmatprep.subr.mxu0 0.0
        %534 = vmatpush1.msra.mxu0 0.0
        %535 = vmatprep.subr.mxu0 0.0
        %536 = vmatpush1.msra.mxu0 0.0
        %537 = vmatprep.subr.mxu0 0.0
        %538 = vmatpush1.msra.mxu0 0.0
        %539 = vmatprep.subr.mxu0 0.0
        %540 = vmatpush1.msra.mxu0 0.0
        %541 = vmatprep.subr.mxu0 0.0
        %542 = vmatpush1.msra.mxu0 0.0
        %543 = vmatprep.subr.mxu0 0.0
        %544 = vmatpush1.msra.mxu0 0.0
        %545 = vmatprep.subr.mxu0 0.0
        %546 = vmatpush1.msra.mxu0 0.0
        %547 = vmatprep.subr.mxu0 0.0
        %548 = vmatpush1.msra.mxu0 0.0
        %549 = vmatprep.subr.mxu0 0.0
        %550 = vmatpush1.msra.mxu0 0.0
        %551 = vmatprep.subr.mxu0 0.0
        %552 = vmatpush1.msra.mxu0 0.0
        %553 = vmatprep.subr.mxu0 0.0
        %554 = vmatpush1.msra.mxu0 0.0
        %555 = vmatprep.subr.mxu0 0.0
        %556 = vmatpush1.msra.mxu0 0.0
        %557 = vmatprep.subr.mxu0 0.0
        %558 = vmatpush1.msra.mxu0 0.0
        %559 = vmatprep.subr.mxu0 0.0
        %560 = vmatpush1.msra.mxu0 0.0
        %561 = vmatprep.subr.mxu0 0.0
        %562 = vmatpush1.msra.mxu0 0.0
        %563 = vmatprep.subr.mxu0 0.0
        %564 = vmatpush1.msra.mxu0 0.0
        %565 = vmatprep.subr.mxu0 0.0
        %566 = vmatpush1.msra.mxu0 0.0
        %567 = vmatprep.subr.mxu0 0.0
        %568 = vmatpush1.msra.mxu0 0.0
        %569 = vmatprep.subr.mxu0 0.0
        %570 = vmatpush1.msra.mxu0 0.0
        %571 = vmatprep.subr.mxu0 0.0
        %572 = vmatpush1.msra.mxu0 0.0
        %573 = vmatprep.subr.mxu0 0.0
        %574 = vmatpush1.msra.mxu0 0.0
        %575 = vmatprep.subr.mxu0 0.0
        %576 = vmatpush1.msra.mxu0 0.0
        %577 = vmatprep.subr.mxu0 0.0
        %578 = vmatpush1.msra.mxu0 0.0
        %579 = vmatprep.subr.mxu0 0.0
        %580 = vmatpush1.msra.mxu0 0.0
        %581 = vmatprep.mubr.f32.mxu0 0.0
        %582 = vmatmul.mubr.f32.gmra.mrb[0].mxu0 %v515
        %v583 = vpop.f32.mrb[0].mxu0
        %v584 = vadd.f32 %v511, %v583
        %v585 = vpop.f32.mrb[0].mxu0
        %586 = vdwg.mxu0
        %v587 = vld [vmem:[#allocation7] sm:$0xff]
        %v588 = vld [vmem:[#allocation7 + $0x8] sm:$0xff]
        %v589 = vld [vmem:[#allocation7 + $0x10] sm:$0xff]
        %v590 = vld [vmem:[#allocation7 + $0x18] sm:$0xff]
        %v591 = vld [vmem:[%s5] sm:$0x1]
        %v593 = vlaneseq
        %v594 = vshrl.u32 %v593, 7
        %v595 = vsub.s32 0, %v594
        %v596 = vrot.slane %v591, %v595
        %v599 = vsel %vm513, %v501, 0
        %601 = vmatprep.subr.mxu0 0.0
        %602 = vmatpush1.msra.mxu0 %v587
        %603 = vmatprep.subr.mxu0 0.0
        %604 = vmatpush1.msra.mxu0 %v588
        %605 = vmatprep.subr.mxu0 0.0
        %606 = vmatpush1.msra.mxu0 %v589
        %607 = vmatprep.subr.mxu0 0.0
        %608 = vmatpush1.msra.mxu0 %v590
        %609 = vmatprep.subr.mxu0 0.0
        %610 = vmatpush1.msra.mxu0 0.0
        %611 = vmatprep.subr.mxu0 0.0
        %612 = vmatpush1.msra.mxu0 0.0
        %613 = vmatprep.subr.mxu0 0.0
        %614 = vmatpush1.msra.mxu0 0.0
        %615 = vmatprep.subr.mxu0 0.0
        %616 = vmatpush1.msra.mxu0 0.0
        %617 = vmatprep.subr.mxu0 0.0
        %618 = vmatpush1.msra.mxu0 0.0
        %619 = vmatprep.subr.mxu0 0.0
        %620 = vmatpush1.msra.mxu0 0.0
        %621 = vmatprep.subr.mxu0 0.0
        %622 = vmatpush1.msra.mxu0 0.0
        %623 = vmatprep.subr.mxu0 0.0
        %624 = vmatpush1.msra.mxu0 0.0
        %625 = vmatprep.subr.mxu0 0.0
        %626 = vmatpush1.msra.mxu0 0.0
        %627 = vmatprep.subr.mxu0 0.0
        %628 = vmatpush1.msra.mxu0 0.0
        %629 = vmatprep.subr.mxu0 0.0
        %630 = vmatpush1.msra.mxu0 0.0
        %631 = vmatprep.subr.mxu0 0.0
        %632 = vmatpush1.msra.mxu0 0.0
        %633 = vmatprep.subr.mxu0 0.0
        %634 = vmatpush1.msra.mxu0 0.0
        %635 = vmatprep.subr.mxu0 0.0
        %636 = vmatpush1.msra.mxu0 0.0
        %637 = vmatprep.subr.mxu0 0.0
        %638 = vmatpush1.msra.mxu0 0.0
        %639 = vmatprep.subr.mxu0 0.0
        %640 = vmatpush1.msra.mxu0 0.0
        %641 = vmatprep.subr.mxu0 0.0
        %642 = vmatpush1.msra.mxu0 0.0
        %643 = vmatprep.subr.mxu0 0.0
        %644 = vmatpush1.msra.mxu0 0.0
        %645 = vmatprep.subr.mxu0 0.0
        %646 = vmatpush1.msra.mxu0 0.0
        %647 = vmatprep.subr.mxu0 0.0
        %648 = vmatpush1.msra.mxu0 0.0
        %649 = vmatprep.subr.mxu0 0.0
        %650 = vmatpush1.msra.mxu0 0.0
        %651 = vmatprep.subr.mxu0 0.0
        %652 = vmatpush1.msra.mxu0 0.0
        %653 = vmatprep.subr.mxu0 0.0
        %654 = vmatpush1.msra.mxu0 0.0
        %655 = vmatprep.subr.mxu0 0.0
        %656 = vmatpush1.msra.mxu0 0.0
        %657 = vmatprep.subr.mxu0 0.0
        %658 = vmatpush1.msra.mxu0 0.0
        %659 = vmatprep.subr.mxu0 0.0
        %660 = vmatpush1.msra.mxu0 0.0
        %661 = vmatprep.subr.mxu0 0.0
        %662 = vmatpush1.msra.mxu0 0.0
        %663 = vmatprep.subr.mxu0 0.0
        %664 = vmatpush1.msra.mxu0 0.0
        %665 = vmatprep.mubr.f32.mxu0 0.0
        %666 = vmatmul.mubr.f32.gmra.mrb[0].mxu0 %v599
        %v667 = vpop.f32.mrb[0].mxu0
        %v668 = vadd.f32 %v596, %v667
        %v669 = vpop.f32.mrb[0].mxu0
        %670 = vdwg.mxu0
        %v671 = vld [vmem:[#allocation8] sm:$0xff]
        %v673 = vcombine.high %v671, %v671
        %v675 = vunpack.c.l.s4 1966171168
        %v676 = vunpack.c.0.s8 %v675
        %v677 = vlaneseq
        %v678 = vshrl.u32 %v677, 7
        %v679 = vsub.s32 %v676, %v678
        %v680 = vrot.slane %v671, %v679
        %v682 = vunpack.c.l.s4 1966171168
        %v683 = vunpack.c.0.s8 %v682
        %v684 = vlaneseq
        %v685 = vshrl.u32 %v684, 7
        %v686 = vsub.s32 %v683, %v685
        %v687 = vrot.slane %v673, %v686
        %v688 = vcombine.high %v680, %v680
        %v689 = vcombine.high %v687, %v687
        %v691 = vunpack.c.l.s4 1966171168
        %v692 = vunpack.c.0.s8 %v691
        %v693 = vlaneseq
        %v694 = vshrl.u32 %v693, 7
        %v695 = vsub.s32 %v692, %v694
        %v696 = vrot.slane %v680, %v695
        %v698 = vunpack.c.l.s4 1966171168
        %v699 = vunpack.c.0.s8 %v698
        %v700 = vlaneseq
        %v701 = vshrl.u32 %v700, 7
        %v702 = vsub.s32 %v699, %v701
        %v703 = vrot.slane %v687, %v702
        %v705 = vunpack.c.l.s4 1966171168
        %v706 = vunpack.c.0.s8 %v705
        %v707 = vlaneseq
        %v708 = vshrl.u32 %v707, 7
        %v709 = vsub.s32 %v706, %v708
        %v710 = vrot.slane %v688, %v709
        %v712 = vunpack.c.l.s4 1966171168
        %v713 = vunpack.c.0.s8 %v712
        %v714 = vlaneseq
        %v715 = vshrl.u32 %v714, 7
        %v716 = vsub.s32 %v713, %v715
        %v717 = vrot.slane %v689, %v716
        %v718 = vcombine.high %v696, %v696
        %v719 = vcombine.high %v703, %v703
        %v720 = vcombine.high %v710, %v710
        %v721 = vcombine.high %v717, %v717
        %v722 = vlaneseq
        %v723 = vshrl.u32 %v722, 7
        %v724 = vsub.s32 0, %v723
        %v725 = vrot.slane %v696, %v724
        %v726 = vlaneseq
        %v727 = vshrl.u32 %v726, 7
        %v728 = vsub.s32 0, %v727
        %v729 = vrot.slane %v710, %v728
        %v730 = vlaneseq
        %v731 = vshrl.u32 %v730, 7
        %v732 = vsub.s32 0, %v731
        %v733 = vrot.slane %v718, %v732
        %v734 = vlaneseq
        %v735 = vshrl.u32 %v734, 7
        %v736 = vsub.s32 0, %v735
        %v737 = vrot.slane %v720, %v736
        %v738 = vlaneseq
        %v739 = vshrl.u32 %v738, 7
        %v740 = vsub.s32 0, %v739
        %v741 = vrot.slane %v703, %v740
        %v742 = vlaneseq
        %v743 = vshrl.u32 %v742, 7
        %v744 = vsub.s32 0, %v743
        %v745 = vrot.slane %v717, %v744
        %v746 = vlaneseq
        %v747 = vshrl.u32 %v746, 7
        %v748 = vsub.s32 0, %v747
        %v749 = vrot.slane %v719, %v748
        %v750 = vlaneseq
        %v751 = vshrl.u32 %v750, 7
        %v752 = vsub.s32 0, %v751
        %v753 = vrot.slane %v721, %v752
        %v762 = vmul.f32 %v584, %v725
        %v763 = vmul.f32 %v584, %v729
        %v764 = vmul.f32 %v584, %v733
        %v765 = vmul.f32 %v584, %v737
        %v766 = vmul.f32 %v584, %v741
        %v767 = vmul.f32 %v584, %v745
        %v768 = vmul.f32 %v584, %v749
        %v769 = vmul.f32 %v584, %v753
        %v770 = vld [vmem:[%s451] sm:$0xff]
        %v772 = vsel %vm513, %v762, 0
        %v775 = vsel %vm513, %v763, 0
        %v778 = vsel %vm513, %v764, 0
        %v781 = vsel %vm513, %v765, 0
        %v784 = vsel %vm513, %v766, 0
        %v787 = vsel %vm513, %v767, 0
        %v790 = vsel %vm513, %v768, 0
        %v793 = vsel %vm513, %v769, 0
        %v796 = vsel %vm513, %v668, 0
        %798 = vmatprep.subr.mxu0 0.0
        %799 = vmatpush1.xpose.msra.mxu0 %v796
        %800 = vmatprep.subr.mxu0 0.0
        %801 = vmatpush1.xpose.msra.mxu0 0.0
        %802 = vmatprep.subr.mxu0 0.0
        %803 = vmatpush1.xpose.msra.mxu0 0.0
        %804 = vmatprep.subr.mxu0 0.0
        %805 = vmatpush1.xpose.msra.mxu0 0.0
        %806 = vmatprep.subr.mxu0 0.0
        %807 = vmatpush1.xpose.msra.mxu0 0.0
        %808 = vmatprep.subr.mxu0 0.0
        %809 = vmatpush1.xpose.msra.mxu0 0.0
        %810 = vmatprep.subr.mxu0 0.0
        %811 = vmatpush1.xpose.msra.mxu0 0.0
        %812 = vmatprep.subr.mxu0 0.0
        %813 = vmatpush1.xpose.msra.mxu0 0.0
        %814 = vmatprep.subr.mxu0 0.0
        %815 = vmatpush1.xpose.msra.mxu0 0.0
        %816 = vmatprep.subr.mxu0 0.0
        %817 = vmatpush1.xpose.msra.mxu0 0.0
        %818 = vmatprep.subr.mxu0 0.0
        %819 = vmatpush1.xpose.msra.mxu0 0.0
        %820 = vmatprep.subr.mxu0 0.0
        %821 = vmatpush1.xpose.msra.mxu0 0.0
        %822 = vmatprep.subr.mxu0 0.0
        %823 = vmatpush1.xpose.msra.mxu0 0.0
        %824 = vmatprep.subr.mxu0 0.0
        %825 = vmatpush1.xpose.msra.mxu0 0.0
        %826 = vmatprep.subr.mxu0 0.0
        %827 = vmatpush1.xpose.msra.mxu0 0.0
        %828 = vmatprep.subr.mxu0 0.0
        %829 = vmatpush1.xpose.msra.mxu0 0.0
        %830 = vmatprep.subr.mxu0 0.0
        %831 = vmatpush1.xpose.msra.mxu0 0.0
        %832 = vmatprep.subr.mxu0 0.0
        %833 = vmatpush1.xpose.msra.mxu0 0.0
        %834 = vmatprep.subr.mxu0 0.0
        %835 = vmatpush1.xpose.msra.mxu0 0.0
        %836 = vmatprep.subr.mxu0 0.0
        %837 = vmatpush1.xpose.msra.mxu0 0.0
        %838 = vmatprep.subr.mxu0 0.0
        %839 = vmatpush1.xpose.msra.mxu0 0.0
        %840 = vmatprep.subr.mxu0 0.0
        %841 = vmatpush1.xpose.msra.mxu0 0.0
        %842 = vmatprep.subr.mxu0 0.0
        %843 = vmatpush1.xpose.msra.mxu0 0.0
        %844 = vmatprep.subr.mxu0 0.0
        %845 = vmatpush1.xpose.msra.mxu0 0.0
        %846 = vmatprep.subr.mxu0 0.0
        %847 = vmatpush1.xpose.msra.mxu0 0.0
        %848 = vmatprep.subr.mxu0 0.0
        %849 = vmatpush1.xpose.msra.mxu0 0.0
        %850 = vmatprep.subr.mxu0 0.0
        %851 = vmatpush1.xpose.msra.mxu0 0.0
        %852 = vmatprep.subr.mxu0 0.0
        %853 = vmatpush1.xpose.msra.mxu0 0.0
        %854 = vmatprep.subr.mxu0 0.0
        %855 = vmatpush1.xpose.msra.mxu0 0.0
        %856 = vmatprep.subr.mxu0 0.0
        %857 = vmatpush1.xpose.msra.mxu0 0.0
        %858 = vmatprep.subr.mxu0 0.0
        %859 = vmatpush1.xpose.msra.mxu0 0.0
        %860 = vmatprep.subr.mxu0 0.0
        %861 = vmatpush1.xpose.msra.mxu0 0.0
        %862 = vmatprep.mubr.f32.mxu0 0.0
        %863 = vmatmul.mubr.f32.gmra.mrb[0].mxu0 %v772
        %v864 = vpop.f32.mrb[0].mxu0
        %v865 = vadd.f32 %v770, %v864
        %v866 = vpop.f32.mrb[0].mxu0
        %867 = vmatprep.mubr.f32.mxu0 0.0
        %868 = vmatmul.mubr.f32.gmra.mrb[0].mxu0 %v775
        %v869 = vpop.f32.mrb[0].mxu0
        %v870 = vadd.f32 %v770, %v869
        %v871 = vpop.f32.mrb[0].mxu0
        %872 = vmatprep.mubr.f32.mxu0 0.0
        %873 = vmatmul.mubr.f32.gmra.mrb[0].mxu0 %v778
        %v874 = vpop.f32.mrb[0].mxu0
        %v875 = vadd.f32 %v770, %v874
        %v876 = vpop.f32.mrb[0].mxu0
        %877 = vmatprep.mubr.f32.mxu0 0.0
        %878 = vmatmul.mubr.f32.gmra.mrb[0].mxu0 %v781
        %v879 = vpop.f32.mrb[0].mxu0
        %v880 = vadd.f32 %v770, %v879
        %v881 = vpop.f32.mrb[0].mxu0
        %882 = vmatprep.mubr.f32.mxu0 0.0
        %883 = vmatmul.mubr.f32.gmra.mrb[0].mxu0 %v784
        %v884 = vpop.f32.mrb[0].mxu0
        %v885 = vadd.f32 %v770, %v884
        %v886 = vpop.f32.mrb[0].mxu0
        %887 = vmatprep.mubr.f32.mxu0 0.0
        %888 = vmatmul.mubr.f32.gmra.mrb[0].mxu0 %v787
        %v889 = vpop.f32.mrb[0].mxu0
        %v890 = vadd.f32 %v770, %v889
        %v891 = vpop.f32.mrb[0].mxu0
        %892 = vmatprep.mubr.f32.mxu0 0.0
        %893 = vmatmul.mubr.f32.gmra.mrb[0].mxu0 %v790
        %v894 = vpop.f32.mrb[0].mxu0
        %v895 = vadd.f32 %v770, %v894
        %v896 = vpop.f32.mrb[0].mxu0
        %897 = vmatprep.mubr.f32.mxu0 0.0
        %898 = vmatmul.mubr.f32.gmra.mrb[0].mxu0 %v793
        %v899 = vpop.f32.mrb[0].mxu0
        %v900 = vadd.f32 %v770, %v899
        %v901 = vpop.f32.mrb[0].mxu0
        %902 = vdwg.mxu0
        %vm903 = vcmask 64512
        %v904 = vsel %vm903, %v865, -inf
        %905 = vmax.xlane.f32.xlu0 %v904
        %v906 = vpop.xlane.xlu0 %905
        %v907 = vsel %vm903, %v870, -inf
        %908 = vmax.xlane.f32.xlu0 %v907
        %v909 = vpop.xlane.xlu0 %908
        %v910 = vsel %vm903, %v875, -inf
        %911 = vmax.xlane.f32.xlu0 %v910
        %v912 = vpop.xlane.xlu0 %911
        %v913 = vsel %vm903, %v880, -inf
        %914 = vmax.xlane.f32.xlu0 %v913
        %v915 = vpop.xlane.xlu0 %914
        %v916 = vsel %vm903, %v885, -inf
        %917 = vmax.xlane.f32.xlu0 %v916
        %v918 = vpop.xlane.xlu0 %917
        %v919 = vsel %vm903, %v890, -inf
        %920 = vmax.xlane.f32.xlu0 %v919
        %v921 = vpop.xlane.xlu0 %920
        %v922 = vsel %vm903, %v895, -inf
        %923 = vmax.xlane.f32.xlu0 %v922
        %v924 = vpop.xlane.xlu0 %923
        %v925 = vsel %vm903, %v900, -inf
        %926 = vmax.xlane.f32.xlu0 %v925
        %v927 = vpop.xlane.xlu0 %926
        %v928 = vsub.f32 %v865, %v906
        %v929 = vsub.f32 %v870, %v909
        %v930 = vsub.f32 %v875, %v912
        %v931 = vsub.f32 %v880, %v915
        %v932 = vsub.f32 %v885, %v918
        %v933 = vsub.f32 %v890, %v921
        %v934 = vsub.f32 %v895, %v924
        %v935 = vsub.f32 %v900, %v927
        %v936 = vmul.f32 %v928, 1.442695
        %v937 = vpow.pop %v936
        %v938 = vmul.f32 %v929, 1.442695
        %v939 = vpow.pop %v938
        %v940 = vmul.f32 %v930, 1.442695
        %v941 = vpow.pop %v940
        %v942 = vmul.f32 %v931, 1.442695
        %v943 = vpow.pop %v942
        %v944 = vmul.f32 %v932, 1.442695
        %v945 = vpow.pop %v944
        %v946 = vmul.f32 %v933, 1.442695
        %v947 = vpow.pop %v946
        %v948 = vmul.f32 %v934, 1.442695
        %v949 = vpow.pop %v948
        %v950 = vmul.f32 %v935, 1.442695
        %v951 = vpow.pop %v950
        %v952 = vsel %vm903, %v937, 0.0
        %953 = vadd.xlane.f32.xlu0 %v952
        %v954 = vpop.xlane.xlu0 %953
        %v955 = vsel %vm903, %v939, 0.0
        %956 = vadd.xlane.f32.xlu0 %v955
        %v957 = vpop.xlane.xlu0 %956
        %v958 = vsel %vm903, %v941, 0.0
        %959 = vadd.xlane.f32.xlu0 %v958
        %v960 = vpop.xlane.xlu0 %959
        %v961 = vsel %vm903, %v943, 0.0
        %962 = vadd.xlane.f32.xlu0 %v961
        %v963 = vpop.xlane.xlu0 %962
        %v964 = vsel %vm903, %v945, 0.0
        %965 = vadd.xlane.f32.xlu0 %v964
        %v966 = vpop.xlane.xlu0 %965
        %v967 = vsel %vm903, %v947, 0.0
        %968 = vadd.xlane.f32.xlu0 %v967
        %v969 = vpop.xlane.xlu0 %968
        %v970 = vsel %vm903, %v949, 0.0
        %971 = vadd.xlane.f32.xlu0 %v970
        %v972 = vpop.xlane.xlu0 %971
        %v973 = vsel %vm903, %v951, 0.0
        %974 = vadd.xlane.f32.xlu0 %v973
        %v975 = vpop.xlane.xlu0 %974
        %v976 = vrcp.pop %v954
        %v977 = vmul.f32 %v937, %v976
        %v978 = vrcp.pop %v957
        %v979 = vmul.f32 %v939, %v978
        %v980 = vrcp.pop %v960
        %v981 = vmul.f32 %v941, %v980
        %v982 = vrcp.pop %v963
        %v983 = vmul.f32 %v943, %v982
        %v984 = vrcp.pop %v966
        %v985 = vmul.f32 %v945, %v984
        %v986 = vrcp.pop %v969
        %v987 = vmul.f32 %v947, %v986
        %v988 = vrcp.pop %v972
        %v989 = vmul.f32 %v949, %v988
        %v990 = vrcp.pop %v975
        %v991 = vmul.f32 %v951, %v990
        %v993 = vsel %vm903, %v977, 0
        %v996 = vsel %vm903, %v979, 0
        %v999 = vsel %vm903, %v981, 0
        %v1002 = vsel %vm903, %v983, 0
        %v1005 = vsel %vm903, %v985, 0
        %v1008 = vsel %vm903, %v987, 0
        %v1011 = vsel %vm903, %v989, 0
        %v1014 = vsel %vm903, %v991, 0
        %1016 = vmatprep.subr.mxu0 0.0
        %1017 = vmatpush1.msra.mxu0 %v671
        %1018 = vmatprep.subr.mxu0 0.0
        %1019 = vmatpush1.msra.mxu0 0.0
        %1020 = vmatprep.subr.mxu0 0.0
        %1021 = vmatpush1.msra.mxu0 0.0
        %1022 = vmatprep.subr.mxu0 0.0
        %1023 = vmatpush1.msra.mxu0 0.0
        %1024 = vmatprep.subr.mxu0 0.0
        %1025 = vmatpush1.msra.mxu0 0.0
        %1026 = vmatprep.subr.mxu0 0.0
        %1027 = vmatpush1.msra.mxu0 0.0
        %1028 = vmatprep.subr.mxu0 0.0
        %1029 = vmatpush1.msra.mxu0 0.0
        %1030 = vmatprep.subr.mxu0 0.0
        %1031 = vmatpush1.msra.mxu0 0.0
        %1032 = vmatprep.subr.mxu0 0.0
        %1033 = vmatpush1.msra.mxu0 0.0
        %1034 = vmatprep.subr.mxu0 0.0
        %1035 = vmatpush1.msra.mxu0 0.0
        %1036 = vmatprep.subr.mxu0 0.0
        %1037 = vmatpush1.msra.mxu0 0.0
        %1038 = vmatprep.subr.mxu0 0.0
        %1039 = vmatpush1.msra.mxu0 0.0
        %1040 = vmatprep.subr.mxu0 0.0
        %1041 = vmatpush1.msra.mxu0 0.0
        %1042 = vmatprep.subr.mxu0 0.0
        %1043 = vmatpush1.msra.mxu0 0.0
        %1044 = vmatprep.subr.mxu0 0.0
        %1045 = vmatpush1.msra.mxu0 0.0
        %1046 = vmatprep.subr.mxu0 0.0
        %1047 = vmatpush1.msra.mxu0 0.0
        %1048 = vmatprep.subr.mxu0 0.0
        %1049 = vmatpush1.msra.mxu0 0.0
        %1050 = vmatprep.subr.mxu0 0.0
        %1051 = vmatpush1.msra.mxu0 0.0
        %1052 = vmatprep.subr.mxu0 0.0
        %1053 = vmatpush1.msra.mxu0 0.0
        %1054 = vmatprep.subr.mxu0 0.0
        %1055 = vmatpush1.msra.mxu0 0.0
        %1056 = vmatprep.subr.mxu0 0.0
        %1057 = vmatpush1.msra.mxu0 0.0
        %1058 = vmatprep.subr.mxu0 0.0
        %1059 = vmatpush1.msra.mxu0 0.0
        %1060 = vmatprep.subr.mxu0 0.0
        %1061 = vmatpush1.msra.mxu0 0.0
        %1062 = vmatprep.subr.mxu0 0.0
        %1063 = vmatpush1.msra.mxu0 0.0
        %1064 = vmatprep.subr.mxu0 0.0
        %1065 = vmatpush1.msra.mxu0 0.0
        %1066 = vmatprep.subr.mxu0 0.0
        %1067 = vmatpush1.msra.mxu0 0.0
        %1068 = vmatprep.subr.mxu0 0.0
        %1069 = vmatpush1.msra.mxu0 0.0
        %1070 = vmatprep.subr.mxu0 0.0
        %1071 = vmatpush1.msra.mxu0 0.0
        %1072 = vmatprep.subr.mxu0 0.0
        %1073 = vmatpush1.msra.mxu0 0.0
        %1074 = vmatprep.subr.mxu0 0.0
        %1075 = vmatpush1.msra.mxu0 0.0
        %1076 = vmatprep.subr.mxu0 0.0
        %1077 = vmatpush1.msra.mxu0 0.0
        %1078 = vmatprep.subr.mxu0 0.0
        %1079 = vmatpush1.msra.mxu0 0.0
        %1080 = vmatprep.mubr.f32.mxu0 0.0
        %1081 = vmatmul.mubr.f32.gmra.mrb[0].mxu0 %v993
        %v1082 = vpop.f32.mrb[0].mxu0
        %v1083 = vadd.f32 0.0, %v1082
        %v1084 = vpop.f32.mrb[0].mxu0
        %1085 = vmatprep.mubr.f32.mxu0 0.0
        %1086 = vmatmul.mubr.f32.gmra.mrb[0].mxu0 %v996
        %v1087 = vpop.f32.mrb[0].mxu0
        %v1088 = vadd.f32 0.0, %v1087
        %v1089 = vpop.f32.mrb[0].mxu0
        %1090 = vmatprep.mubr.f32.mxu0 0.0
        %1091 = vmatmul.mubr.f32.gmra.mrb[0].mxu0 %v999
        %v1092 = vpop.f32.mrb[0].mxu0
        %v1093 = vadd.f32 0.0, %v1092
        %v1094 = vpop.f32.mrb[0].mxu0
        %1095 = vmatprep.mubr.f32.mxu0 0.0
        %1096 = vmatmul.mubr.f32.gmra.mrb[0].mxu0 %v1002
        %v1097 = vpop.f32.mrb[0].mxu0
        %v1098 = vadd.f32 0.0, %v1097
        %v1099 = vpop.f32.mrb[0].mxu0
        %1100 = vmatprep.mubr.f32.mxu0 0.0
        %1101 = vmatmul.mubr.f32.gmra.mrb[0].mxu0 %v1005
        %v1102 = vpop.f32.mrb[0].mxu0
        %v1103 = vadd.f32 0.0, %v1102
        %v1104 = vpop.f32.mrb[0].mxu0
        %1105 = vmatprep.mubr.f32.mxu0 0.0
        %1106 = vmatmul.mubr.f32.gmra.mrb[0].mxu0 %v1008
        %v1107 = vpop.f32.mrb[0].mxu0
        %v1108 = vadd.f32 0.0, %v1107
        %v1109 = vpop.f32.mrb[0].mxu0
        %1110 = vmatprep.mubr.f32.mxu0 0.0
        %1111 = vmatmul.mubr.f32.gmra.mrb[0].mxu0 %v1011
        %v1112 = vpop.f32.mrb[0].mxu0
        %v1113 = vadd.f32 0.0, %v1112
        %v1114 = vpop.f32.mrb[0].mxu0
        %1115 = vmatprep.mubr.f32.mxu0 0.0
        %1116 = vmatmul.mubr.f32.gmra.mrb[0].mxu0 %v1014
        %v1117 = vpop.f32.mrb[0].mxu0
        %v1118 = vadd.f32 0.0, %v1117
        %v1119 = vpop.f32.mrb[0].mxu0
        %1120 = vdwg.mxu0
        %v1122 = vcombine.high %v584, %v584
        %v1124 = vunpack.c.l.s4 1966171168
        %v1125 = vunpack.c.0.s8 %v1124
        %v1126 = vlaneseq
        %v1127 = vshrl.u32 %v1126, 7
        %v1128 = vsub.s32 %v1125, %v1127
        %v1129 = vrot.slane %v584, %v1128
        %v1131 = vunpack.c.l.s4 1966171168
        %v1132 = vunpack.c.0.s8 %v1131
        %v1133 = vlaneseq
        %v1134 = vshrl.u32 %v1133, 7
        %v1135 = vsub.s32 %v1132, %v1134
        %v1136 = vrot.slane %v1122, %v1135
        %v1137 = vcombine.high %v1129, %v1129
        %v1138 = vcombine.high %v1136, %v1136
        %v1140 = vunpack.c.l.s4 1966171168
        %v1141 = vunpack.c.0.s8 %v1140
        %v1142 = vlaneseq
        %v1143 = vshrl.u32 %v1142, 7
        %v1144 = vsub.s32 %v1141, %v1143
        %v1145 = vrot.slane %v1129, %v1144
        %v1147 = vunpack.c.l.s4 1966171168
        %v1148 = vunpack.c.0.s8 %v1147
        %v1149 = vlaneseq
        %v1150 = vshrl.u32 %v1149, 7
        %v1151 = vsub.s32 %v1148, %v1150
        %v1152 = vrot.slane %v1136, %v1151
        %v1154 = vunpack.c.l.s4 1966171168
        %v1155 = vunpack.c.0.s8 %v1154
        %v1156 = vlaneseq
        %v1157 = vshrl.u32 %v1156, 7
        %v1158 = vsub.s32 %v1155, %v1157
        %v1159 = vrot.slane %v1137, %v1158
        %v1161 = vunpack.c.l.s4 1966171168
        %v1162 = vunpack.c.0.s8 %v1161
        %v1163 = vlaneseq
        %v1164 = vshrl.u32 %v1163, 7
        %v1165 = vsub.s32 %v1162, %v1164
        %v1166 = vrot.slane %v1138, %v1165
        %v1167 = vcombine.high %v1145, %v1145
        %v1168 = vcombine.high %v1152, %v1152
        %v1169 = vcombine.high %v1159, %v1159
        %v1170 = vcombine.high %v1166, %v1166
        %v1171 = vlaneseq
        %v1172 = vshrl.u32 %v1171, 7
        %v1173 = vsub.s32 0, %v1172
        %v1174 = vrot.slane %v1145, %v1173
        %v1175 = vlaneseq
        %v1176 = vshrl.u32 %v1175, 7
        %v1177 = vsub.s32 0, %v1176
        %v1178 = vrot.slane %v1159, %v1177
        %v1179 = vlaneseq
        %v1180 = vshrl.u32 %v1179, 7
        %v1181 = vsub.s32 0, %v1180
        %v1182 = vrot.slane %v1167, %v1181
        %v1183 = vlaneseq
        %v1184 = vshrl.u32 %v1183, 7
        %v1185 = vsub.s32 0, %v1184
        %v1186 = vrot.slane %v1169, %v1185
        %v1187 = vlaneseq
        %v1188 = vshrl.u32 %v1187, 7
        %v1189 = vsub.s32 0, %v1188
        %v1190 = vrot.slane %v1152, %v1189
        %v1191 = vlaneseq
        %v1192 = vshrl.u32 %v1191, 7
        %v1193 = vsub.s32 0, %v1192
        %v1194 = vrot.slane %v1166, %v1193
        %v1195 = vlaneseq
        %v1196 = vshrl.u32 %v1195, 7
        %v1197 = vsub.s32 0, %v1196
        %v1198 = vrot.slane %v1168, %v1197
        %v1199 = vlaneseq
        %v1200 = vshrl.u32 %v1199, 7
        %v1201 = vsub.s32 0, %v1200
        %v1202 = vrot.slane %v1170, %v1201
        %v1211 = vmul.f32 %v1083, %v1174
        %v1212 = vmul.f32 %v1088, %v1178
        %v1213 = vmul.f32 %v1093, %v1182
        %v1214 = vmul.f32 %v1098, %v1186
        %v1215 = vmul.f32 %v1103, %v1190
        %v1216 = vmul.f32 %v1108, %v1194
        %v1217 = vmul.f32 %v1113, %v1198
        %v1218 = vmul.f32 %v1118, %v1202
        %v1219 = vld [vmem:[%s7] sm:$0xff]
        %v1220 = vld [vmem:[%s7 + $0x8] sm:$0xff]
        %v1221 = vld [vmem:[%s7 + $0x10] sm:$0xff]
        %v1222 = vld [vmem:[%s7 + $0x18] sm:$0xff]
        %v1224 = vsel %vm513, %v1211, 0
        %v1227 = vsel %vm513, %v1212, 0
        %v1230 = vsel %vm513, %v1213, 0
        %v1233 = vsel %vm513, %v1214, 0
        %v1236 = vsel %vm513, %v1215, 0
        %v1239 = vsel %vm513, %v1216, 0
        %v1242 = vsel %vm513, %v1217, 0
        %v1245 = vsel %vm513, %v1218, 0
        %1247 = vmatprep.subr.mxu0 0.0
        %1248 = vmatpush1.msra.mxu0 %v1219
        %1249 = vmatprep.subr.mxu0 0.0
        %1250 = vmatpush1.msra.mxu0 %v1220
        %1251 = vmatprep.subr.mxu0 0.0
        %1252 = vmatpush1.msra.mxu0 %v1221
        %1253 = vmatprep.subr.mxu0 0.0
        %1254 = vmatpush1.msra.mxu0 %v1222
        %1255 = vmatprep.subr.mxu0 0.0
        %1256 = vmatpush1.msra.mxu0 0.0
        %1257 = vmatprep.subr.mxu0 0.0
        %1258 = vmatpush1.msra.mxu0 0.0
        %1259 = vmatprep.subr.mxu0 0.0
        %1260 = vmatpush1.msra.mxu0 0.0
        %1261 = vmatprep.subr.mxu0 0.0
        %1262 = vmatpush1.msra.mxu0 0.0
        %1263 = vmatprep.subr.mxu0 0.0
        %1264 = vmatpush1.msra.mxu0 0.0
        %1265 = vmatprep.subr.mxu0 0.0
        %1266 = vmatpush1.msra.mxu0 0.0
        %1267 = vmatprep.subr.mxu0 0.0
        %1268 = vmatpush1.msra.mxu0 0.0
        %1269 = vmatprep.subr.mxu0 0.0
        %1270 = vmatpush1.msra.mxu0 0.0
        %1271 = vmatprep.subr.mxu0 0.0
        %1272 = vmatpush1.msra.mxu0 0.0
        %1273 = vmatprep.subr.mxu0 0.0
        %1274 = vmatpush1.msra.mxu0 0.0
        %1275 = vmatprep.subr.mxu0 0.0
        %1276 = vmatpush1.msra.mxu0 0.0
        %1277 = vmatprep.subr.mxu0 0.0
        %1278 = vmatpush1.msra.mxu0 0.0
        %1279 = vmatprep.subr.mxu0 0.0
        %1280 = vmatpush1.msra.mxu0 0.0
        %1281 = vmatprep.subr.mxu0 0.0
        %1282 = vmatpush1.msra.mxu0 0.0
        %1283 = vmatprep.subr.mxu0 0.0
        %1284 = vmatpush1.msra.mxu0 0.0
        %1285 = vmatprep.subr.mxu0 0.0
        %1286 = vmatpush1.msra.mxu0 0.0
        %1287 = vmatprep.subr.mxu0 0.0
        %1288 = vmatpush1.msra.mxu0 0.0
        %1289 = vmatprep.subr.mxu0 0.0
        %1290 = vmatpush1.msra.mxu0 0.0
        %1291 = vmatprep.subr.mxu0 0.0
        %1292 = vmatpush1.msra.mxu0 0.0
        %1293 = vmatprep.subr.mxu0 0.0
        %1294 = vmatpush1.msra.mxu0 0.0
        %1295 = vmatprep.subr.mxu0 0.0
        %1296 = vmatpush1.msra.mxu0 0.0
        %1297 = vmatprep.subr.mxu0 0.0
        %1298 = vmatpush1.msra.mxu0 0.0
        %1299 = vmatprep.subr.mxu0 0.0
        %1300 = vmatpush1.msra.mxu0 0.0
        %1301 = vmatprep.subr.mxu0 0.0
        %1302 = vmatpush1.msra.mxu0 0.0
        %1303 = vmatprep.subr.mxu0 0.0
        %1304 = vmatpush1.msra.mxu0 0.0
        %1305 = vmatprep.subr.mxu0 0.0
        %1306 = vmatpush1.msra.mxu0 0.0
        %1307 = vmatprep.subr.mxu0 0.0
        %1308 = vmatpush1.msra.mxu0 0.0
        %1309 = vmatprep.subr.mxu0 0.0
        %1310 = vmatpush1.msra.mxu0 0.0
        %1311 = vmatprep.mubr.f32.mxu0 0.0
        %1312 = vmatmul.mubr.f32.gmra.mrb[0].mxu0 %v1224
        %v1313 = vpop.f32.mrb[0].mxu0
        %v1314 = vadd.f32 0.0, %v1313
        %v1315 = vpop.f32.mrb[0].mxu0
        %1316 = vmatprep.mubr.f32.mxu0 0.0
        %1317 = vmatmul.mubr.f32.gmra.mrb[0].mxu0 %v1227
        %v1318 = vpop.f32.mrb[0].mxu0
        %v1319 = vadd.f32 0.0, %v1318
        %v1320 = vpop.f32.mrb[0].mxu0
        %1321 = vmatprep.mubr.f32.mxu0 0.0
        %1322 = vmatmul.mubr.f32.gmra.mrb[0].mxu0 %v1230
        %v1323 = vpop.f32.mrb[0].mxu0
        %v1324 = vadd.f32 0.0, %v1323
        %v1325 = vpop.f32.mrb[0].mxu0
        %1326 = vmatprep.mubr.f32.mxu0 0.0
        %1327 = vmatmul.mubr.f32.gmra.mrb[0].mxu0 %v1233
        %v1328 = vpop.f32.mrb[0].mxu0
        %v1329 = vadd.f32 0.0, %v1328
        %v1330 = vpop.f32.mrb[0].mxu0
        %1331 = vmatprep.mubr.f32.mxu0 0.0
        %1332 = vmatmul.mubr.f32.gmra.mrb[0].mxu0 %v1236
        %v1333 = vpop.f32.mrb[0].mxu0
        %v1334 = vadd.f32 0.0, %v1333
        %v1335 = vpop.f32.mrb[0].mxu0
        %1336 = vmatprep.mubr.f32.mxu0 0.0
        %1337 = vmatmul.mubr.f32.gmra.mrb[0].mxu0 %v1239
        %v1338 = vpop.f32.mrb[0].mxu0
        %v1339 = vadd.f32 0.0, %v1338
        %v1340 = vpop.f32.mrb[0].mxu0
        %1341 = vmatprep.mubr.f32.mxu0 0.0
        %1342 = vmatmul.mubr.f32.gmra.mrb[0].mxu0 %v1242
        %v1343 = vpop.f32.mrb[0].mxu0
        %v1344 = vadd.f32 0.0, %v1343
        %v1345 = vpop.f32.mrb[0].mxu0
        %1346 = vmatprep.mubr.f32.mxu0 0.0
        %1347 = vmatmul.mubr.f32.gmra.mrb[0].mxu0 %v1245
        %v1348 = vpop.f32.mrb[0].mxu0
        %v1349 = vadd.f32 0.0, %v1348
        %v1350 = vpop.f32.mrb[0].mxu0
        %1351 = vdwg.mxu0
        %v1352 = vld [vmem:[%s8] sm:$0xf]
        %v1353 = vld [vmem:[%s8 + $0x4] sm:$0xf]
        %v1354 = vld [vmem:[%s8 + $0x8] sm:$0xf]
        %v1355 = vld [vmem:[%s8 + $0xc] sm:$0xf]
        %v1356 = vld [vmem:[%s8 + $0x10] sm:$0xf]
        %v1357 = vld [vmem:[%s8 + $0x14] sm:$0xf]
        %v1358 = vld [vmem:[%s8 + $0x18] sm:$0xf]
        %v1359 = vld [vmem:[%s8 + $0x1c] sm:$0xf]
        %vm1360 = vcmask 31744
        %v1362 = vsel %vm1360, %v1314, 0
        %vm1364 = vcmask 1043456
        %v1366 = vsel %vm1364, %v1352, 0
        %1368 = vmatprep.subr.mxu0 0.0
        %1369 = vmatpush1.msra.mxu0 %v1366
        %1370 = vmatprep.subr.mxu0 0.0
        %1371 = vmatpush1.msra.mxu0 0.0
        %1372 = vmatprep.subr.mxu0 0.0
        %1373 = vmatpush1.msra.mxu0 0.0
        %1374 = vmatprep.subr.mxu0 0.0
        %1375 = vmatpush1.msra.mxu0 0.0
        %1376 = vmatprep.subr.mxu0 0.0
        %1377 = vmatpush1.msra.mxu0 0.0
        %1378 = vmatprep.subr.mxu0 0.0
        %1379 = vmatpush1.msra.mxu0 0.0
        %1380 = vmatprep.subr.mxu0 0.0
        %1381 = vmatpush1.msra.mxu0 0.0
        %1382 = vmatprep.subr.mxu0 0.0
        %1383 = vmatpush1.msra.mxu0 0.0
        %1384 = vmatprep.subr.mxu0 0.0
        %1385 = vmatpush1.msra.mxu0 0.0
        %1386 = vmatprep.subr.mxu0 0.0
        %1387 = vmatpush1.msra.mxu0 0.0
        %1388 = vmatprep.subr.mxu0 0.0
        %1389 = vmatpush1.msra.mxu0 0.0
        %1390 = vmatprep.subr.mxu0 0.0
        %1391 = vmatpush1.msra.mxu0 0.0
        %1392 = vmatprep.subr.mxu0 0.0
        %1393 = vmatpush1.msra.mxu0 0.0
        %1394 = vmatprep.subr.mxu0 0.0
        %1395 = vmatpush1.msra.mxu0 0.0
        %1396 = vmatprep.subr.mxu0 0.0
        %1397 = vmatpush1.msra.mxu0 0.0
        %1398 = vmatprep.subr.mxu0 0.0
        %1399 = vmatpush1.msra.mxu0 0.0
        %1400 = vmatprep.subr.mxu0 0.0
        %1401 = vmatpush1.msra.mxu0 0.0
        %1402 = vmatprep.subr.mxu0 0.0
        %1403 = vmatpush1.msra.mxu0 0.0
        %1404 = vmatprep.subr.mxu0 0.0
        %1405 = vmatpush1.msra.mxu0 0.0
        %1406 = vmatprep.subr.mxu0 0.0
        %1407 = vmatpush1.msra.mxu0 0.0
        %1408 = vmatprep.subr.mxu0 0.0
        %1409 = vmatpush1.msra.mxu0 0.0
        %1410 = vmatprep.subr.mxu0 0.0
        %1411 = vmatpush1.msra.mxu0 0.0
        %1412 = vmatprep.subr.mxu0 0.0
        %1413 = vmatpush1.msra.mxu0 0.0
        %1414 = vmatprep.subr.mxu0 0.0
        %1415 = vmatpush1.msra.mxu0 0.0
        %1416 = vmatprep.subr.mxu0 0.0
        %1417 = vmatpush1.msra.mxu0 0.0
        %1418 = vmatprep.subr.mxu0 0.0
        %1419 = vmatpush1.msra.mxu0 0.0
        %1420 = vmatprep.subr.mxu0 0.0
        %1421 = vmatpush1.msra.mxu0 0.0
        %1422 = vmatprep.subr.mxu0 0.0
        %1423 = vmatpush1.msra.mxu0 0.0
        %1424 = vmatprep.subr.mxu0 0.0
        %1425 = vmatpush1.msra.mxu0 0.0
        %1426 = vmatprep.subr.mxu0 0.0
        %1427 = vmatpush1.msra.mxu0 0.0
        %1428 = vmatprep.subr.mxu0 0.0
        %1429 = vmatpush1.msra.mxu0 0.0
        %1430 = vmatprep.subr.mxu0 0.0
        %1431 = vmatpush1.msra.mxu0 0.0
        %1432 = vmatprep.mubr.f32.mxu0 0.0
        %1433 = vmatmul.mubr.f32.gmra.mrb[0].mxu0 %v1362
        %v1434 = vpop.f32.mrb[0].mxu0
        %v1435 = vadd.f32 0.0, %v1434
        %v1436 = vpop.f32.mrb[0].mxu0
        %1437 = vdwg.mxu0
        %v1439 = vsel %vm1360, %v1319, 0
        %v1442 = vsel %vm1364, %v1353, 0
        %1444 = vmatprep.subr.mxu0 0.0
        %1445 = vmatpush1.msra.mxu0 %v1442
        %1446 = vmatprep.subr.mxu0 0.0
        %1447 = vmatpush1.msra.mxu0 0.0
        %1448 = vmatprep.subr.mxu0 0.0
        %1449 = vmatpush1.msra.mxu0 0.0
        %1450 = vmatprep.subr.mxu0 0.0
        %1451 = vmatpush1.msra.mxu0 0.0
        %1452 = vmatprep.subr.mxu0 0.0
        %1453 = vmatpush1.msra.mxu0 0.0
        %1454 = vmatprep.subr.mxu0 0.0
        %1455 = vmatpush1.msra.mxu0 0.0
        %1456 = vmatprep.subr.mxu0 0.0
        %1457 = vmatpush1.msra.mxu0 0.0
        %1458 = vmatprep.subr.mxu0 0.0
        %1459 = vmatpush1.msra.mxu0 0.0
        %1460 = vmatprep.subr.mxu0 0.0
        %1461 = vmatpush1.msra.mxu0 0.0
        %1462 = vmatprep.subr.mxu0 0.0
        %1463 = vmatpush1.msra.mxu0 0.0
        %1464 = vmatprep.subr.mxu0 0.0
        %1465 = vmatpush1.msra.mxu0 0.0
        %1466 = vmatprep.subr.mxu0 0.0
        %1467 = vmatpush1.msra.mxu0 0.0
        %1468 = vmatprep.subr.mxu0 0.0
        %1469 = vmatpush1.msra.mxu0 0.0
        %1470 = vmatprep.subr.mxu0 0.0
        %1471 = vmatpush1.msra.mxu0 0.0
        %1472 = vmatprep.subr.mxu0 0.0
        %1473 = vmatpush1.msra.mxu0 0.0
        %1474 = vmatprep.subr.mxu0 0.0
        %1475 = vmatpush1.msra.mxu0 0.0
        %1476 = vmatprep.subr.mxu0 0.0
        %1477 = vmatpush1.msra.mxu0 0.0
        %1478 = vmatprep.subr.mxu0 0.0
        %1479 = vmatpush1.msra.mxu0 0.0
        %1480 = vmatprep.subr.mxu0 0.0
        %1481 = vmatpush1.msra.mxu0 0.0
        %1482 = vmatprep.subr.mxu0 0.0
        %1483 = vmatpush1.msra.mxu0 0.0
        %1484 = vmatprep.subr.mxu0 0.0
        %1485 = vmatpush1.msra.mxu0 0.0
        %1486 = vmatprep.subr.mxu0 0.0
        %1487 = vmatpush1.msra.mxu0 0.0
        %1488 = vmatprep.subr.mxu0 0.0
        %1489 = vmatpush1.msra.mxu0 0.0
        %1490 = vmatprep.subr.mxu0 0.0
        %1491 = vmatpush1.msra.mxu0 0.0
        %1492 = vmatprep.subr.mxu0 0.0
        %1493 = vmatpush1.msra.mxu0 0.0
        %1494 = vmatprep.subr.mxu0 0.0
        %1495 = vmatpush1.msra.mxu0 0.0
        %1496 = vmatprep.subr.mxu0 0.0
        %1497 = vmatpush1.msra.mxu0 0.0
        %1498 = vmatprep.subr.mxu0 0.0
        %1499 = vmatpush1.msra.mxu0 0.0
        %1500 = vmatprep.subr.mxu0 0.0
        %1501 = vmatpush1.msra.mxu0 0.0
        %1502 = vmatprep.subr.mxu0 0.0
        %1503 = vmatpush1.msra.mxu0 0.0
        %1504 = vmatprep.subr.mxu0 0.0
        %1505 = vmatpush1.msra.mxu0 0.0
        %1506 = vmatprep.subr.mxu0 0.0
        %1507 = vmatpush1.msra.mxu0 0.0
        %1508 = vmatprep.mubr.f32.mxu0 0.0
        %1509 = vmatmul.mubr.f32.gmra.mrb[0].mxu0 %v1439
        %v1510 = vpop.f32.mrb[0].mxu0
        %v1511 = vadd.f32 0.0, %v1510
        %v1512 = vpop.f32.mrb[0].mxu0
        %1513 = vdwg.mxu0
        %v1515 = vsel %vm1360, %v1324, 0
        %v1518 = vsel %vm1364, %v1354, 0
        %1520 = vmatprep.subr.mxu0 0.0
        %1521 = vmatpush1.msra.mxu0 %v1518
        %1522 = vmatprep.subr.mxu0 0.0
        %1523 = vmatpush1.msra.mxu0 0.0
        %1524 = vmatprep.subr.mxu0 0.0
        %1525 = vmatpush1.msra.mxu0 0.0
        %1526 = vmatprep.subr.mxu0 0.0
        %1527 = vmatpush1.msra.mxu0 0.0
        %1528 = vmatprep.subr.mxu0 0.0
        %1529 = vmatpush1.msra.mxu0 0.0
        %1530 = vmatprep.subr.mxu0 0.0
        %1531 = vmatpush1.msra.mxu0 0.0
        %1532 = vmatprep.subr.mxu0 0.0
        %1533 = vmatpush1.msra.mxu0 0.0
        %1534 = vmatprep.subr.mxu0 0.0
        %1535 = vmatpush1.msra.mxu0 0.0
        %1536 = vmatprep.subr.mxu0 0.0
        %1537 = vmatpush1.msra.mxu0 0.0
        %1538 = vmatprep.subr.mxu0 0.0
        %1539 = vmatpush1.msra.mxu0 0.0
        %1540 = vmatprep.subr.mxu0 0.0
        %1541 = vmatpush1.msra.mxu0 0.0
        %1542 = vmatprep.subr.mxu0 0.0
        %1543 = vmatpush1.msra.mxu0 0.0
        %1544 = vmatprep.subr.mxu0 0.0
        %1545 = vmatpush1.msra.mxu0 0.0
        %1546 = vmatprep.subr.mxu0 0.0
        %1547 = vmatpush1.msra.mxu0 0.0
        %1548 = vmatprep.subr.mxu0 0.0
        %1549 = vmatpush1.msra.mxu0 0.0
        %1550 = vmatprep.subr.mxu0 0.0
        %1551 = vmatpush1.msra.mxu0 0.0
        %1552 = vmatprep.subr.mxu0 0.0
        %1553 = vmatpush1.msra.mxu0 0.0
        %1554 = vmatprep.subr.mxu0 0.0
        %1555 = vmatpush1.msra.mxu0 0.0
        %1556 = vmatprep.subr.mxu0 0.0
        %1557 = vmatpush1.msra.mxu0 0.0
        %1558 = vmatprep.subr.mxu0 0.0
        %1559 = vmatpush1.msra.mxu0 0.0
        %1560 = vmatprep.subr.mxu0 0.0
        %1561 = vmatpush1.msra.mxu0 0.0
        %1562 = vmatprep.subr.mxu0 0.0
        %1563 = vmatpush1.msra.mxu0 0.0
        %1564 = vmatprep.subr.mxu0 0.0
        %1565 = vmatpush1.msra.mxu0 0.0
        %1566 = vmatprep.subr.mxu0 0.0
        %1567 = vmatpush1.msra.mxu0 0.0
        %1568 = vmatprep.subr.mxu0 0.0
        %1569 = vmatpush1.msra.mxu0 0.0
        %1570 = vmatprep.subr.mxu0 0.0
        %1571 = vmatpush1.msra.mxu0 0.0
        %1572 = vmatprep.subr.mxu0 0.0
        %1573 = vmatpush1.msra.mxu0 0.0
        %1574 = vmatprep.subr.mxu0 0.0
        %1575 = vmatpush1.msra.mxu0 0.0
        %1576 = vmatprep.subr.mxu0 0.0
        %1577 = vmatpush1.msra.mxu0 0.0
        %1578 = vmatprep.subr.mxu0 0.0
        %1579 = vmatpush1.msra.mxu0 0.0
        %1580 = vmatprep.subr.mxu0 0.0
        %1581 = vmatpush1.msra.mxu0 0.0
        %1582 = vmatprep.subr.mxu0 0.0
        %1583 = vmatpush1.msra.mxu0 0.0
        %1584 = vmatprep.mubr.f32.mxu0 0.0
        %1585 = vmatmul.mubr.f32.gmra.mrb[0].mxu0 %v1515
        %v1586 = vpop.f32.mrb[0].mxu0
        %v1587 = vadd.f32 0.0, %v1586
        %v1588 = vpop.f32.mrb[0].mxu0
        %1589 = vdwg.mxu0
        %v1591 = vsel %vm1360, %v1329, 0
        %v1594 = vsel %vm1364, %v1355, 0
        %1596 = vmatprep.subr.mxu0 0.0
        %1597 = vmatpush1.msra.mxu0 %v1594
        %1598 = vmatprep.subr.mxu0 0.0
        %1599 = vmatpush1.msra.mxu0 0.0
        %1600 = vmatprep.subr.mxu0 0.0
        %1601 = vmatpush1.msra.mxu0 0.0
        %1602 = vmatprep.subr.mxu0 0.0
        %1603 = vmatpush1.msra.mxu0 0.0
        %1604 = vmatprep.subr.mxu0 0.0
        %1605 = vmatpush1.msra.mxu0 0.0
        %1606 = vmatprep.subr.mxu0 0.0
        %1607 = vmatpush1.msra.mxu0 0.0
        %1608 = vmatprep.subr.mxu0 0.0
        %1609 = vmatpush1.msra.mxu0 0.0
        %1610 = vmatprep.subr.mxu0 0.0
        %1611 = vmatpush1.msra.mxu0 0.0
        %1612 = vmatprep.subr.mxu0 0.0
        %1613 = vmatpush1.msra.mxu0 0.0
        %1614 = vmatprep.subr.mxu0 0.0
        %1615 = vmatpush1.msra.mxu0 0.0
        %1616 = vmatprep.subr.mxu0 0.0
        %1617 = vmatpush1.msra.mxu0 0.0
        %1618 = vmatprep.subr.mxu0 0.0
        %1619 = vmatpush1.msra.mxu0 0.0
        %1620 = vmatprep.subr.mxu0 0.0
        %1621 = vmatpush1.msra.mxu0 0.0
        %1622 = vmatprep.subr.mxu0 0.0
        %1623 = vmatpush1.msra.mxu0 0.0
        %1624 = vmatprep.subr.mxu0 0.0
        %1625 = vmatpush1.msra.mxu0 0.0
        %1626 = vmatprep.subr.mxu0 0.0
        %1627 = vmatpush1.msra.mxu0 0.0
        %1628 = vmatprep.subr.mxu0 0.0
        %1629 = vmatpush1.msra.mxu0 0.0
        %1630 = vmatprep.subr.mxu0 0.0
        %1631 = vmatpush1.msra.mxu0 0.0
        %1632 = vmatprep.subr.mxu0 0.0
        %1633 = vmatpush1.msra.mxu0 0.0
        %1634 = vmatprep.subr.mxu0 0.0
        %1635 = vmatpush1.msra.mxu0 0.0
        %1636 = vmatprep.subr.mxu0 0.0
        %1637 = vmatpush1.msra.mxu0 0.0
        %1638 = vmatprep.subr.mxu0 0.0
        %1639 = vmatpush1.msra.mxu0 0.0
        %1640 = vmatprep.subr.mxu0 0.0
        %1641 = vmatpush1.msra.mxu0 0.0
        %1642 = vmatprep.subr.mxu0 0.0
        %1643 = vmatpush1.msra.mxu0 0.0
        %1644 = vmatprep.subr.mxu0 0.0
        %1645 = vmatpush1.msra.mxu0 0.0
        %1646 = vmatprep.subr.mxu0 0.0
        %1647 = vmatpush1.msra.mxu0 0.0
        %1648 = vmatprep.subr.mxu0 0.0
        %1649 = vmatpush1.msra.mxu0 0.0
        %1650 = vmatprep.subr.mxu0 0.0
        %1651 = vmatpush1.msra.mxu0 0.0
        %1652 = vmatprep.subr.mxu0 0.0
        %1653 = vmatpush1.msra.mxu0 0.0
        %1654 = vmatprep.subr.mxu0 0.0
        %1655 = vmatpush1.msra.mxu0 0.0
        %1656 = vmatprep.subr.mxu0 0.0
        %1657 = vmatpush1.msra.mxu0 0.0
        %1658 = vmatprep.subr.mxu0 0.0
        %1659 = vmatpush1.msra.mxu0 0.0
        %1660 = vmatprep.mubr.f32.mxu0 0.0
        %1661 = vmatmul.mubr.f32.gmra.mrb[0].mxu0 %v1591
        %v1662 = vpop.f32.mrb[0].mxu0
        %v1663 = vadd.f32 0.0, %v1662
        %v1664 = vpop.f32.mrb[0].mxu0
        %1665 = vdwg.mxu0
        %v1667 = vsel %vm1360, %v1334, 0
        %v1670 = vsel %vm1364, %v1356, 0
        %1672 = vmatprep.subr.mxu0 0.0
        %1673 = vmatpush1.msra.mxu0 %v1670
        %1674 = vmatprep.subr.mxu0 0.0
        %1675 = vmatpush1.msra.mxu0 0.0
        %1676 = vmatprep.subr.mxu0 0.0
        %1677 = vmatpush1.msra.mxu0 0.0
        %1678 = vmatprep.subr.mxu0 0.0
        %1679 = vmatpush1.msra.mxu0 0.0
        %1680 = vmatprep.subr.mxu0 0.0
        %1681 = vmatpush1.msra.mxu0 0.0
        %1682 = vmatprep.subr.mxu0 0.0
        %1683 = vmatpush1.msra.mxu0 0.0
        %1684 = vmatprep.subr.mxu0 0.0
        %1685 = vmatpush1.msra.mxu0 0.0
        %1686 = vmatprep.subr.mxu0 0.0
        %1687 = vmatpush1.msra.mxu0 0.0
        %1688 = vmatprep.subr.mxu0 0.0
        %1689 = vmatpush1.msra.mxu0 0.0
        %1690 = vmatprep.subr.mxu0 0.0
        %1691 = vmatpush1.msra.mxu0 0.0
        %1692 = vmatprep.subr.mxu0 0.0
        %1693 = vmatpush1.msra.mxu0 0.0
        %1694 = vmatprep.subr.mxu0 0.0
        %1695 = vmatpush1.msra.mxu0 0.0
        %1696 = vmatprep.subr.mxu0 0.0
        %1697 = vmatpush1.msra.mxu0 0.0
        %1698 = vmatprep.subr.mxu0 0.0
        %1699 = vmatpush1.msra.mxu0 0.0
        %1700 = vmatprep.subr.mxu0 0.0
        %1701 = vmatpush1.msra.mxu0 0.0
        %1702 = vmatprep.subr.mxu0 0.0
        %1703 = vmatpush1.msra.mxu0 0.0
        %1704 = vmatprep.subr.mxu0 0.0
        %1705 = vmatpush1.msra.mxu0 0.0
        %1706 = vmatprep.subr.mxu0 0.0
        %1707 = vmatpush1.msra.mxu0 0.0
        %1708 = vmatprep.subr.mxu0 0.0
        %1709 = vmatpush1.msra.mxu0 0.0
        %1710 = vmatprep.subr.mxu0 0.0
        %1711 = vmatpush1.msra.mxu0 0.0
        %1712 = vmatprep.subr.mxu0 0.0
        %1713 = vmatpush1.msra.mxu0 0.0
        %1714 = vmatprep.subr.mxu0 0.0
        %1715 = vmatpush1.msra.mxu0 0.0
        %1716 = vmatprep.subr.mxu0 0.0
        %1717 = vmatpush1.msra.mxu0 0.0
        %1718 = vmatprep.subr.mxu0 0.0
        %1719 = vmatpush1.msra.mxu0 0.0
        %1720 = vmatprep.subr.mxu0 0.0
        %1721 = vmatpush1.msra.mxu0 0.0
        %1722 = vmatprep.subr.mxu0 0.0
        %1723 = vmatpush1.msra.mxu0 0.0
        %1724 = vmatprep.subr.mxu0 0.0
        %1725 = vmatpush1.msra.mxu0 0.0
        %1726 = vmatprep.subr.mxu0 0.0
        %1727 = vmatpush1.msra.mxu0 0.0
        %1728 = vmatprep.subr.mxu0 0.0
        %1729 = vmatpush1.msra.mxu0 0.0
        %1730 = vmatprep.subr.mxu0 0.0
        %1731 = vmatpush1.msra.mxu0 0.0
        %1732 = vmatprep.subr.mxu0 0.0
        %1733 = vmatpush1.msra.mxu0 0.0
        %1734 = vmatprep.subr.mxu0 0.0
        %1735 = vmatpush1.msra.mxu0 0.0
        %1736 = vmatprep.mubr.f32.mxu0 0.0
        %1737 = vmatmul.mubr.f32.gmra.mrb[0].mxu0 %v1667
        %v1738 = vpop.f32.mrb[0].mxu0
        %v1739 = vadd.f32 0.0, %v1738
        %v1740 = vpop.f32.mrb[0].mxu0
        %1741 = vdwg.mxu0
        %v1743 = vsel %vm1360, %v1339, 0
        %v1746 = vsel %vm1364, %v1357, 0
        %1748 = vmatprep.subr.mxu0 0.0
        %1749 = vmatpush1.msra.mxu0 %v1746
        %1750 = vmatprep.subr.mxu0 0.0
        %1751 = vmatpush1.msra.mxu0 0.0
        %1752 = vmatprep.subr.mxu0 0.0
        %1753 = vmatpush1.msra.mxu0 0.0
        %1754 = vmatprep.subr.mxu0 0.0
        %1755 = vmatpush1.msra.mxu0 0.0
        %1756 = vmatprep.subr.mxu0 0.0
        %1757 = vmatpush1.msra.mxu0 0.0
        %1758 = vmatprep.subr.mxu0 0.0
        %1759 = vmatpush1.msra.mxu0 0.0
        %1760 = vmatprep.subr.mxu0 0.0
        %1761 = vmatpush1.msra.mxu0 0.0
        %1762 = vmatprep.subr.mxu0 0.0
        %1763 = vmatpush1.msra.mxu0 0.0
        %1764 = vmatprep.subr.mxu0 0.0
        %1765 = vmatpush1.msra.mxu0 0.0
        %1766 = vmatprep.subr.mxu0 0.0
        %1767 = vmatpush1.msra.mxu0 0.0
        %1768 = vmatprep.subr.mxu0 0.0
        %1769 = vmatpush1.msra.mxu0 0.0
        %1770 = vmatprep.subr.mxu0 0.0
        %1771 = vmatpush1.msra.mxu0 0.0
        %1772 = vmatprep.subr.mxu0 0.0
        %1773 = vmatpush1.msra.mxu0 0.0
        %1774 = vmatprep.subr.mxu0 0.0
        %1775 = vmatpush1.msra.mxu0 0.0
        %1776 = vmatprep.subr.mxu0 0.0
        %1777 = vmatpush1.msra.mxu0 0.0
        %1778 = vmatprep.subr.mxu0 0.0
        %1779 = vmatpush1.msra.mxu0 0.0
        %1780 = vmatprep.subr.mxu0 0.0
        %1781 = vmatpush1.msra.mxu0 0.0
        %1782 = vmatprep.subr.mxu0 0.0
        %1783 = vmatpush1.msra.mxu0 0.0
        %1784 = vmatprep.subr.mxu0 0.0
        %1785 = vmatpush1.msra.mxu0 0.0
        %1786 = vmatprep.subr.mxu0 0.0
        %1787 = vmatpush1.msra.mxu0 0.0
        %1788 = vmatprep.subr.mxu0 0.0
        %1789 = vmatpush1.msra.mxu0 0.0
        %1790 = vmatprep.subr.mxu0 0.0
        %1791 = vmatpush1.msra.mxu0 0.0
        %1792 = vmatprep.subr.mxu0 0.0
        %1793 = vmatpush1.msra.mxu0 0.0
        %1794 = vmatprep.subr.mxu0 0.0
        %1795 = vmatpush1.msra.mxu0 0.0
        %1796 = vmatprep.subr.mxu0 0.0
        %1797 = vmatpush1.msra.mxu0 0.0
        %1798 = vmatprep.subr.mxu0 0.0
        %1799 = vmatpush1.msra.mxu0 0.0
        %1800 = vmatprep.subr.mxu0 0.0
        %1801 = vmatpush1.msra.mxu0 0.0
        %1802 = vmatprep.subr.mxu0 0.0
        %1803 = vmatpush1.msra.mxu0 0.0
        %1804 = vmatprep.subr.mxu0 0.0
        %1805 = vmatpush1.msra.mxu0 0.0
        %1806 = vmatprep.subr.mxu0 0.0
        %1807 = vmatpush1.msra.mxu0 0.0
        %1808 = vmatprep.subr.mxu0 0.0
        %1809 = vmatpush1.msra.mxu0 0.0
        %1810 = vmatprep.subr.mxu0 0.0
        %1811 = vmatpush1.msra.mxu0 0.0
        %1812 = vmatprep.mubr.f32.mxu0 0.0
        %1813 = vmatmul.mubr.f32.gmra.mrb[0].mxu0 %v1743
        %v1814 = vpop.f32.mrb[0].mxu0
        %v1815 = vadd.f32 0.0, %v1814
        %v1816 = vpop.f32.mrb[0].mxu0
        %1817 = vdwg.mxu0
        %v1819 = vsel %vm1360, %v1344, 0
        %v1822 = vsel %vm1364, %v1358, 0
        %1824 = vmatprep.subr.mxu0 0.0
        %1825 = vmatpush1.msra.mxu0 %v1822
        %1826 = vmatprep.subr.mxu0 0.0
        %1827 = vmatpush1.msra.mxu0 0.0
        %1828 = vmatprep.subr.mxu0 0.0
        %1829 = vmatpush1.msra.mxu0 0.0
        %1830 = vmatprep.subr.mxu0 0.0
        %1831 = vmatpush1.msra.mxu0 0.0
        %1832 = vmatprep.subr.mxu0 0.0
        %1833 = vmatpush1.msra.mxu0 0.0
        %1834 = vmatprep.subr.mxu0 0.0
        %1835 = vmatpush1.msra.mxu0 0.0
        %1836 = vmatprep.subr.mxu0 0.0
        %1837 = vmatpush1.msra.mxu0 0.0
        %1838 = vmatprep.subr.mxu0 0.0
        %1839 = vmatpush1.msra.mxu0 0.0
        %1840 = vmatprep.subr.mxu0 0.0
        %1841 = vmatpush1.msra.mxu0 0.0
        %1842 = vmatprep.subr.mxu0 0.0
        %1843 = vmatpush1.msra.mxu0 0.0
        %1844 = vmatprep.subr.mxu0 0.0
        %1845 = vmatpush1.msra.mxu0 0.0
        %1846 = vmatprep.subr.mxu0 0.0
        %1847 = vmatpush1.msra.mxu0 0.0
        %1848 = vmatprep.subr.mxu0 0.0
        %1849 = vmatpush1.msra.mxu0 0.0
        %1850 = vmatprep.subr.mxu0 0.0
        %1851 = vmatpush1.msra.mxu0 0.0
        %1852 = vmatprep.subr.mxu0 0.0
        %1853 = vmatpush1.msra.mxu0 0.0
        %1854 = vmatprep.subr.mxu0 0.0
        %1855 = vmatpush1.msra.mxu0 0.0
        %1856 = vmatprep.subr.mxu0 0.0
        %1857 = vmatpush1.msra.mxu0 0.0
        %1858 = vmatprep.subr.mxu0 0.0
        %1859 = vmatpush1.msra.mxu0 0.0
        %1860 = vmatprep.subr.mxu0 0.0
        %1861 = vmatpush1.msra.mxu0 0.0
        %1862 = vmatprep.subr.mxu0 0.0
        %1863 = vmatpush1.msra.mxu0 0.0
        %1864 = vmatprep.subr.mxu0 0.0
        %1865 = vmatpush1.msra.mxu0 0.0
        %1866 = vmatprep.subr.mxu0 0.0
        %1867 = vmatpush1.msra.mxu0 0.0
        %1868 = vmatprep.subr.mxu0 0.0
        %1869 = vmatpush1.msra.mxu0 0.0
        %1870 = vmatprep.subr.mxu0 0.0
        %1871 = vmatpush1.msra.mxu0 0.0
        %1872 = vmatprep.subr.mxu0 0.0
        %1873 = vmatpush1.msra.mxu0 0.0
        %1874 = vmatprep.subr.mxu0 0.0
        %1875 = vmatpush1.msra.mxu0 0.0
        %1876 = vmatprep.subr.mxu0 0.0
        %1877 = vmatpush1.msra.mxu0 0.0
        %1878 = vmatprep.subr.mxu0 0.0
        %1879 = vmatpush1.msra.mxu0 0.0
        %1880 = vmatprep.subr.mxu0 0.0
        %1881 = vmatpush1.msra.mxu0 0.0
        %1882 = vmatprep.subr.mxu0 0.0
        %1883 = vmatpush1.msra.mxu0 0.0
        %1884 = vmatprep.subr.mxu0 0.0
        %1885 = vmatpush1.msra.mxu0 0.0
        %1886 = vmatprep.subr.mxu0 0.0
        %1887 = vmatpush1.msra.mxu0 0.0
        %1888 = vmatprep.mubr.f32.mxu0 0.0
        %1889 = vmatmul.mubr.f32.gmra.mrb[0].mxu0 %v1819
        %v1890 = vpop.f32.mrb[0].mxu0
        %v1891 = vadd.f32 0.0, %v1890
        %v1892 = vpop.f32.mrb[0].mxu0
        %1893 = vdwg.mxu0
        %v1895 = vsel %vm1360, %v1349, 0
        %v1898 = vsel %vm1364, %v1359, 0
        %1900 = vmatprep.subr.mxu0 0.0
        %1901 = vmatpush1.msra.mxu0 %v1898
        %1902 = vmatprep.subr.mxu0 0.0
        %1903 = vmatpush1.msra.mxu0 0.0
        %1904 = vmatprep.subr.mxu0 0.0
        %1905 = vmatpush1.msra.mxu0 0.0
        %1906 = vmatprep.subr.mxu0 0.0
        %1907 = vmatpush1.msra.mxu0 0.0
        %1908 = vmatprep.subr.mxu0 0.0
        %1909 = vmatpush1.msra.mxu0 0.0
        %1910 = vmatprep.subr.mxu0 0.0
        %1911 = vmatpush1.msra.mxu0 0.0
        %1912 = vmatprep.subr.mxu0 0.0
        %1913 = vmatpush1.msra.mxu0 0.0
        %1914 = vmatprep.subr.mxu0 0.0
        %1915 = vmatpush1.msra.mxu0 0.0
        %1916 = vmatprep.subr.mxu0 0.0
        %1917 = vmatpush1.msra.mxu0 0.0
        %1918 = vmatprep.subr.mxu0 0.0
        %1919 = vmatpush1.msra.mxu0 0.0
        %1920 = vmatprep.subr.mxu0 0.0
        %1921 = vmatpush1.msra.mxu0 0.0
        %1922 = vmatprep.subr.mxu0 0.0
        %1923 = vmatpush1.msra.mxu0 0.0
        %1924 = vmatprep.subr.mxu0 0.0
        %1925 = vmatpush1.msra.mxu0 0.0
        %1926 = vmatprep.subr.mxu0 0.0
        %1927 = vmatpush1.msra.mxu0 0.0
        %1928 = vmatprep.subr.mxu0 0.0
        %1929 = vmatpush1.msra.mxu0 0.0
        %1930 = vmatprep.subr.mxu0 0.0
        %1931 = vmatpush1.msra.mxu0 0.0
        %1932 = vmatprep.subr.mxu0 0.0
        %1933 = vmatpush1.msra.mxu0 0.0
        %1934 = vmatprep.subr.mxu0 0.0
        %1935 = vmatpush1.msra.mxu0 0.0
        %1936 = vmatprep.subr.mxu0 0.0
        %1937 = vmatpush1.msra.mxu0 0.0
        %1938 = vmatprep.subr.mxu0 0.0
        %1939 = vmatpush1.msra.mxu0 0.0
        %1940 = vmatprep.subr.mxu0 0.0
        %1941 = vmatpush1.msra.mxu0 0.0
        %1942 = vmatprep.subr.mxu0 0.0
        %1943 = vmatpush1.msra.mxu0 0.0
        %1944 = vmatprep.subr.mxu0 0.0
        %1945 = vmatpush1.msra.mxu0 0.0
        %1946 = vmatprep.subr.mxu0 0.0
        %1947 = vmatpush1.msra.mxu0 0.0
        %1948 = vmatprep.subr.mxu0 0.0
        %1949 = vmatpush1.msra.mxu0 0.0
        %1950 = vmatprep.subr.mxu0 0.0
        %1951 = vmatpush1.msra.mxu0 0.0
        %1952 = vmatprep.subr.mxu0 0.0
        %1953 = vmatpush1.msra.mxu0 0.0
        %1954 = vmatprep.subr.mxu0 0.0
        %1955 = vmatpush1.msra.mxu0 0.0
        %1956 = vmatprep.subr.mxu0 0.0
        %1957 = vmatpush1.msra.mxu0 0.0
        %1958 = vmatprep.subr.mxu0 0.0
        %1959 = vmatpush1.msra.mxu0 0.0
        %1960 = vmatprep.subr.mxu0 0.0
        %1961 = vmatpush1.msra.mxu0 0.0
        %1962 = vmatprep.subr.mxu0 0.0
        %1963 = vmatpush1.msra.mxu0 0.0
        %1964 = vmatprep.mubr.f32.mxu0 0.0
        %1965 = vmatmul.mubr.f32.gmra.mrb[0].mxu0 %v1895
        %v1966 = vpop.f32.mrb[0].mxu0
        %v1967 = vadd.f32 0.0, %v1966
        %v1968 = vpop.f32.mrb[0].mxu0
        %1969 = vdwg.mxu0
        %v1970 = vsel %vm513, %v1435, 0.0
        %v1971 = vsel %vm513, %v1511, 0.0
        %v1972 = vadd.f32 %v1970, %v1971
        %v1973 = vsel %vm513, %v1587, 0.0
        %v1974 = vadd.f32 %v1972, %v1973
        %v1975 = vsel %vm513, %v1663, 0.0
        %v1976 = vadd.f32 %v1974, %v1975
        %v1977 = vsel %vm513, %v1739, 0.0
        %v1978 = vadd.f32 %v1976, %v1977
        %v1979 = vsel %vm513, %v1815, 0.0
        %v1980 = vadd.f32 %v1978, %v1979
        %v1981 = vsel %vm513, %v1891, 0.0
        %v1982 = vadd.f32 %v1980, %v1981
        %v1983 = vsel %vm513, %v1967, 0.0
        %v1984 = vadd.f32 %v1982, %v1983
        %v1985 = vld [vmem:[%s9] sm:$0x1]
        %v1987 = vlaneseq
        %v1988 = vshrl.u32 %v1987, 7
        %v1989 = vsub.s32 0, %v1988
        %v1990 = vrot.slane %v1985, %v1989
        %v1992 = vadd.f32 %v1984, %v1990
        %1993 = vst.msk [vmem:[%s499] sm:$0xff] %vm513, %v1992
        %s1994 = sand.u32 %s286, 1
        %s1995 = scalar_lea.sflag [#allocation4], %s1994
        %s1996 = sand.u32 %s286, 1
        %s1997 = smul.addr %s1996, 8
        %s1998 = scalar_lea.vmem [#allocation11], %s1997
        // Predicated region
        $region85: #{tpu_custom_call.1} parent=63 // pred_check
          %p1999 = pneg %p296
        $region86: #{tpu_custom_call.1} parent=63 // pred_check_branch
          %2001 = sbr.rel (%p1999) target = $region88
        $region87: #{tpu_custom_call.1} parent=63 // pred_region
          %s2003 = ssub.s32 128, 128
          %2004 = vsyncadd %s1995, %s2003
          %s2005 = smul.addr %s32, 128
          %s2006 = scalar_lea.hbm %s11, %s2005
          %s2008 = sshll.u32 %s1998, 4
          %s2009 = int_to_ptr.vmem [resolvable:$true] %s2008
          %2011 = dma.vmem_to_hbm [thread:$0]  %s2009, 128, %s2006, %s1995
        $region88: #{tpu_custom_call.1} parent=63 // pred_fallthru
          _
      $region64: #{tpu_custom_call.1} parent=5 // pred_fallthru
        _
      %p2012 = scmp.le.s32.totalorder 2, %s27
      // Predicated region
      $region89: #{tpu_custom_call.1} parent=5 // pred_check
        %p2013 = pneg %p2012
      $region90: #{tpu_custom_call.1} parent=5 // pred_check_branch
        %2015 = sbr.rel (%p2013) target = $region92
      $region91: #{tpu_custom_call.1} parent=5 // pred_region
        %s2016 = ssub.s32 %s27, 2
        // Predicated region
        $region93: #{tpu_custom_call.1} parent=91 // pred_check
          %p2017 = pneg %p302
        $region94: #{tpu_custom_call.1} parent=91 // pred_check_branch
          %2019 = sbr.rel (%p2017) target = $region96
        $region95: #{tpu_custom_call.1} parent=91 // pred_region
          %s2020 = sand.u32 %s287, 1
          %s2021 = scalar_lea.sflag [#allocation4], %s2020
          %s2022 = sand.u32 %s287, 1
          %s2023 = smul.addr %s2022, 8
          %s2024 = scalar_lea.vmem [#allocation11], %s2023
          %2025 = dma.done %s2021, 128
        $region96: #{tpu_custom_call.1} parent=91 // pred_fallthru
          _
      $region92: #{tpu_custom_call.1} parent=5 // pred_fallthru
        _
    $region6: #{tpu_custom_call.1} parent=1 // loop_footer
      %s31 = sadd.s32 1, %s27
    $region7: #{tpu_custom_call.1} parent=1 // loop_footer_branch
      %26 = sbr.rel target = $region3
    $region8: #{tpu_custom_call.1} parent=1 // loop_exit
      _
    %2026 = vsyncpa [#allocation3], 1
    %s2027 = scalar_lea.sflag [#allocation3], 1
    %2028 = vsyncpa %s2027, 1
    %2029 = vsyncpa [#allocation6], 1
    %s2030 = scalar_lea.sflag [#allocation6], 1
    %2031 = vsyncpa %s2030, 1
    %2032 = vsyncpa [#allocation9], 1
    %2033 = vsyncpa [#allocation4], 1
    %s2034 = scalar_lea.sflag [#allocation4], 1
    %2035 = vsyncpa %s2034, 1

</llo_original>
